<compile_context>
chip_gen: v7x
topology: tpu7x:2x2x1
jax: 0.10.0
libtpu: 0.0.40
codegen_flags: <defaults>
</compile_context>

<pallas_src>
import jax
import jax.numpy as jnp
import numpy as np
from jax.experimental import pallas as pl
from jax.experimental.pallas import tpu as pltpu

ACT_DTYPE = jnp.bfloat16      # MXU operand dtype; accumulation stays f32


# --------------------------------------------------------------------------
# fused kernel: conv1+ReLU+pool -> conv2+ReLU+pool -> fc1+ReLU -> fc2
#   x_ref   : (TB, 4, 8, 32)  bf16, x_ref[:, m, k, :] = raw input row 4k+m
#   w1_ref  : (3, 32, 256)    expanded conv1 weights, N = [q*128 + w*8 + c]
#   b1_ref  : (1, 128)        conv1 bias tiled over [w*8 + c]
#   w2_ref  : (3, 128, 256)   expanded conv2 weights, K = [w*8 + c_in],
#                             N = [q*128 + w*16 + c_out]
#   b2_ref  : (1, 128)        conv2 bias tiled over [w*16 + c]
#   wf1_ref : (8, 128, 32)    fc1 weight in the kernel's [h][w*16+c] order
#   bf1_ref : (1, 32), wf2_ref: (32, 1), bf2_ref: (1, 1)
#   o_ref   : (TB, 1) f32     final network output
# --------------------------------------------------------------------------
def _fused_cnn_kernel(x_ref, w1_ref, b1_ref, w2_ref, b2_ref,
                      wf1_ref, bf1_ref, wf2_ref, bf2_ref, o_ref):
    tb = x_ref.shape[0]
    f32 = jnp.float32

    def conv_pool(wins, w_ref, bias):
        # wins[s][:, r, :] = conv-input row (2*r + s) of the (implicitly
        # zero row-padded) input.  The pooled-column parity q is folded into
        # the weight N axis, so the max over the two 128-lane halves plus the
        # max over the two row parities realizes the full 2x2 max-pool.
        m = wins[0].shape[0] * wins[0].shape[1]
        k = wins[0].shape[2]
        flat = tuple(w.reshape(m, k) for w in wins)
        best = None
        for p in range(2):                       # pooled-row parity
            acc = jnp.dot(flat[p], w_ref[0], preferred_element_type=f32)
            for dh in (1, 2):                    # conv kernel row
                acc = acc + jnp.dot(flat[p + dh], w_ref[dh],
                                    preferred_element_type=f32)
            best = acc if best is None else jnp.maximum(best, acc)
        best = jnp.maximum(best[:, :128], best[:, 128:])   # pooled-col parity
        # relu(max(conv)+bias) == max over pool window of relu(conv+bias)
        return jnp.maximum(best + bias, 0.0)                # (m, 128) f32

    # ---- stage 1: conv1(1->8) + bias + ReLU + maxpool(2,2) ----------------
    # Grouping pooled output rows by parity (even i / odd i) makes every
    # window a contiguous slice of the mod-4 row planes, and the stage-1
    # result comes out already de-interleaved for conv2.
    x = x_ref[...]
    xm = [x[:, m, :, :] for m in range(4)]                  # each (tb, 8, 32)
    zr1 = jnp.zeros((tb, 1, 32), x.dtype)
    wins_even = (jnp.concatenate([zr1, xm[3][:, :7, :]], axis=1),   # s=0
                 xm[0], xm[1], xm[2])                               # s=1,2,3
    wins_odd = (xm[1], xm[2], xm[3],                                # s=0,1,2
                jnp.concatenate([xm[0][:, 1:, :], zr1], axis=1))    # s=3

    pe = conv_pool(wins_even, w1_ref, b1_ref[...])   # stage-1 rows 0,2,...,14
    po = conv_pool(wins_odd, w1_ref, b1_ref[...])    # stage-1 rows 1,3,...,15
    pe = pe.reshape(tb, 8, 128).astype(w2_ref.dtype)
    po = po.reshape(tb, 8, 128).astype(w2_ref.dtype)

    # ---- stage 2: conv2(8->16) + bias + ReLU + maxpool(2,2) ---------------
    zr2 = jnp.zeros((tb, 1, 128), pe.dtype)
    wins2 = (jnp.concatenate([zr2, po[:, :7, :]], axis=1),          # s=0
             pe, po,                                                # s=1,2
             jnp.concatenate([pe[:, 1:, :], zr2], axis=1))          # s=3
    pooled2 = conv_pool(wins2, w2_ref, b2_ref[...])                 # (tb*8,128)
    pooled2 = pooled2.reshape(tb, 8, 128).astype(wf1_ref.dtype)

    # ---- fc1 + ReLU + fc2 (contraction over h as 8 lane-dense matmuls) ----
    hidden = jnp.dot(pooled2[:, 0, :], wf1_ref[0], preferred_element_type=f32)
    for h in range(1, 8):
        hidden = hidden + jnp.dot(pooled2[:, h, :], wf1_ref[h],
                                  preferred_element_type=f32)
    hidden = jnp.maximum(hidden + bf1_ref[...], 0.0)
    out = jnp.dot(hidden, wf2_ref[...],
                  preferred_element_type=f32) + bf2_ref[...]
    o_ref[...] = out.astype(o_ref.dtype)


# --------------------------------------------------------------------------
# one-time weight / bias preprocessing (hoisted out of the jitted forward)
# --------------------------------------------------------------------------
def _parity_selector(width, n_out):
    """sel[q, dw, w_in, j] = 1 iff w_in == 2*j + q + dw - 1  (conv pad=1)."""
    sel = np.zeros((2, 3, width, n_out), np.float32)
    for q in range(2):
        for dw in range(3):
            for j in range(n_out):
                c = 2 * j + q + dw - 1
                if 0 <= c < width:
                    sel[q, dw, c, j] = 1.0
    return jnp.asarray(sel)


def prepare_params(params):
    """Expand the 3x3 conv filters into block-structured matmul weights."""
    w1 = jnp.asarray(params["w1"], jnp.float32)          # (8, 1, 3, 3)
    w2 = jnp.asarray(params["w2"], jnp.float32)          # (16, 8, 3, 3)

    # conv1: (3, 32, 256); K = raw input column, N = [q*128 + j*8 + c_out]
    sel1 = _parity_selector(32, 16)
    w1_exp = jnp.einsum("qdwj,chd->hwqjc", sel1, w1[:, 0])
    w1_exp = w1_exp.reshape(3, 32, 2 * 16 * 8).astype(ACT_DTYPE)

    # conv2: (3, 128, 256); K = [w_in*8 + c_in], N = [q*128 + j*16 + c_out]
    sel2 = _parity_selector(16, 8)
    w2_exp = jnp.einsum("qdwj,cihd->hwiqjc", sel2, w2)
    w2_exp = w2_exp.reshape(3, 16 * 8, 2 * 8 * 16).astype(ACT_DTYPE)

    b1_t = jnp.tile(jnp.asarray(params["b1"], jnp.float32), 16).reshape(1, 128)
    b2_t = jnp.tile(jnp.asarray(params["b2"], jnp.float32), 8).reshape(1, 128)

    # fc1: PyTorch NCHW flatten -> kernel's [h][w*16+c] activation order
    wf1 = jnp.asarray(params["wf1"], jnp.float32).reshape(32, 16, 8, 8)
    wf1_arr = (jnp.transpose(wf1, (2, 3, 1, 0))
               .reshape(8, 128, 32).astype(ACT_DTYPE))

    return {
        "w1": w1_exp, "b1": b1_t, "w2": w2_exp, "b2": b2_t,
        "wf1": wf1_arr,
        "bf1": jnp.asarray(params["bf1"], jnp.float32).reshape(1, 32),
        "wf2": jnp.asarray(params["wf2"], jnp.float32).reshape(32, 1),
        "bf2": jnp.asarray(params["bf2"], jnp.float32).reshape(1, 1),
    }


def _pick_batch_tile(b):
    # Largest 8-aligned tile dividing B while keeping >= 2 grid steps
    # (software pipelining + v7x dual-TensorCore sharding of the batch axis).
    for t in (256, 128, 64, 32, 16, 8):
        if b % t == 0 and b // t >= 2:
            return t
    for t in (256, 128, 64, 32, 16, 8):
        if b % t == 0:
            return t
    return b    # single full-size block; legal but unpipelined (tiny B only)


# --------------------------------------------------------------------------
# forward pass
# --------------------------------------------------------------------------
@jax.jit
def even_shallower_cnn_forward(x, prep):
    """x: (B, 32, 32) float32 -> (B, 1) float32 (matches the PyTorch forward)."""
    B, H, W = x.shape
    assert (H, W) == (32, 32), "fc1 expects a 32x32 spatial input"
    tb = _pick_batch_tile(B)

    # layout glue: cast to bf16 and regroup the rows mod 4 so the kernel only
    # ever needs contiguous row blocks (no pad, no strided slices).
    xg = x.astype(ACT_DTYPE).reshape(B, 8, 4, 32).transpose(0, 2, 1, 3)

    out = pl.pallas_call(
        _fused_cnn_kernel,
        out_shape=jax.ShapeDtypeStruct((B, 1), jnp.float32),
        grid=(B // tb,),
        in_specs=[
            pl.BlockSpec((tb, 4, 8, 32), lambda i: (i, 0, 0, 0)),
            # constant operands (same block every grid step)
            pl.BlockSpec((3, 32, 256), lambda i: (0, 0, 0)),
            pl.BlockSpec((1, 128), lambda i: (0, 0)),
            pl.BlockSpec((3, 128, 256), lambda i: (0, 0, 0)),
            pl.BlockSpec((1, 128), lambda i: (0, 0)),
            pl.BlockSpec((8, 128, 32), lambda i: (0, 0, 0)),
            pl.BlockSpec((1, 32), lambda i: (0, 0)),
            pl.BlockSpec((32, 1), lambda i: (0, 0)),
            pl.BlockSpec((1, 1), lambda i: (0, 0)),
        ],
        out_specs=pl.BlockSpec((tb, 1), lambda i: (i, 0)),
        compiler_params=pltpu.CompilerParams(
            dimension_semantics=("parallel",),
            vmem_limit_bytes=32 * 1024 * 1024),
    )(xg, prep["w1"], prep["b1"], prep["w2"], prep["b2"],
      prep["wf1"], prep["bf1"], prep["wf2"], prep["bf2"])
    return out


# --------------------------------------------------------------------------
# pure-JAX reference (f32) and params
# --------------------------------------------------------------------------
def _reference_forward(x, params):
    xf = x[:, None, :, :].astype(jnp.float32)
    y = jax.lax.conv_general_dilated(
        xf, params["w1"], (1, 1), ((1, 1), (1, 1)),
        dimension_numbers=("NCHW", "OIHW", "NCHW"))
    y = jax.nn.relu(y + params["b1"][None, :, None, None])
    y = jax.lax.reduce_window(y, -jnp.inf, jax.lax.max,
                              (1, 1, 2, 2), (1, 1, 2, 2), "VALID")
    y = jax.lax.conv_general_dilated(
        y, params["w2"], (1, 1), ((1, 1), (1, 1)),
        dimension_numbers=("NCHW", "OIHW", "NCHW"))
    y = jax.nn.relu(y + params["b2"][None, :, None, None])
    y = jax.lax.reduce_window(y, -jnp.inf, jax.lax.max,
                              (1, 1, 2, 2), (1, 1, 2, 2), "VALID")
    y = y.reshape(y.shape[0], -1)                      # NCHW flatten
    y = jax.nn.relu(y @ params["wf1"].T + params["bf1"])
    return y @ params["wf2"].T + params["bf2"]


def init_params(key):
    ks = jax.random.split(key, 8)
    return {
        "w1": jax.random.normal(ks[0], (8, 1, 3, 3), jnp.float32) * 0.1,
        "b1": jax.random.normal(ks[1], (8,), jnp.float32) * 0.1,
        "w2": jax.random.normal(ks[2], (16, 8, 3, 3), jnp.float32) * 0.05,
        "b2": jax.random.normal(ks[3], (16,), jnp.float32) * 0.1,
        "wf1": jax.random.normal(ks[4], (32, 16 * 8 * 8), jnp.float32) * 0.03,
        "bf1": jax.random.normal(ks[5], (32,), jnp.float32) * 0.1,
        "wf2": jax.random.normal(ks[6], (1, 32), jnp.float32) * 0.1,
        "bf2": jax.random.normal(ks[7], (1,), jnp.float32) * 0.1,
    }


if __name__ == "__main__":
    key = jax.random.PRNGKey(0)
    k_x, k_p = jax.random.split(key)
    # fc1 expects 16*8*8 features => spatial input must be 32x32
    x = jax.random.normal(k_x, (2, 32, 32), jnp.float32)
    params = init_params(k_p)
    prep = prepare_params(params)          # one-time weight expansion

    out = even_shallower_cnn_forward(x, prep)
    out = jax.block_until_ready(out)
    assert out.shape == (2, 1) and out.dtype == jnp.float32

    ref = _reference_forward(x, params)
    max_err = float(jnp.max(jnp.abs(out - ref)))
    assert max_err < 0.1, f"mismatch vs f32 reference: max_err={max_err}"
    print("KERNEL_OK")
</pallas_src>

<mosaic_0001>
module attributes {stable_mosaic.version = 11 : i64} {
  func.func @_fused_cnn_kernel(%arg0: i32, %arg1: memref<2x4x8x32xbf16, #tpu.memory_space<vmem>>, %arg2: memref<3x32x256xbf16, #tpu.memory_space<vmem>>, %arg3: memref<1x128xf32, #tpu.memory_space<vmem>>, %arg4: memref<3x128x256xbf16, #tpu.memory_space<vmem>>, %arg5: memref<1x128xf32, #tpu.memory_space<vmem>>, %arg6: memref<8x128x32xbf16, #tpu.memory_space<vmem>>, %arg7: memref<1x32xf32, #tpu.memory_space<vmem>>, %arg8: memref<32x1xf32, #tpu.memory_space<vmem>>, %arg9: memref<1x1xf32, #tpu.memory_space<vmem>>, %arg10: memref<2x1xf32, #tpu.memory_space<vmem>>) attributes {dimension_semantics = [#tpu.dimension_semantics<parallel>], iteration_bounds = array<i64: 1>, scalar_prefetch = 0 : i64, scratch_operands = 0 : i64, tpu.core_type = #tpu.core_type<tc>, window_params = [{transform_indices = @transform_0, window_bounds = array<i64: 2, 4, 8, 32>}, {pipeline_mode = #tpu.pipeline_mode<synchronous>, transform_indices = @transform_1, window_bounds = array<i64: 3, 32, 256>}, {pipeline_mode = #tpu.pipeline_mode<synchronous>, transform_indices = @transform_2, window_bounds = array<i64: 1, 128>}, {pipeline_mode = #tpu.pipeline_mode<synchronous>, transform_indices = @transform_3, window_bounds = array<i64: 3, 128, 256>}, {pipeline_mode = #tpu.pipeline_mode<synchronous>, transform_indices = @transform_4, window_bounds = array<i64: 1, 128>}, {pipeline_mode = #tpu.pipeline_mode<synchronous>, transform_indices = @transform_5, window_bounds = array<i64: 8, 128, 32>}, {pipeline_mode = #tpu.pipeline_mode<synchronous>, transform_indices = @transform_6, window_bounds = array<i64: 1, 32>}, {pipeline_mode = #tpu.pipeline_mode<synchronous>, transform_indices = @transform_7, window_bounds = array<i64: 32, 1>}, {pipeline_mode = #tpu.pipeline_mode<synchronous>, transform_indices = @transform_8, window_bounds = array<i64: 1, 1>}, {transform_indices = @transform_9, window_bounds = array<i64: 2, 1>}]} {
    %c0 = arith.constant 0 : index
    %c0_0 = arith.constant 0 : index
    %c0_1 = arith.constant 0 : index
    %c0_2 = arith.constant 0 : index
    %0 = vector.load %arg1[%c0, %c0_0, %c0_1, %c0_2] : memref<2x4x8x32xbf16, #tpu.memory_space<vmem>>, vector<2x4x8x32xbf16>
    %1 = vector.extract_strided_slice %0 {offsets = [0, 0, 0, 0], sizes = [2, 1, 8, 32], strides = [1, 1, 1, 1]} : vector<2x4x8x32xbf16> to vector<2x1x8x32xbf16>
    %2 = vector.shape_cast %1 : vector<2x1x8x32xbf16> to vector<2x8x32xbf16>
    %3 = vector.extract_strided_slice %0 {offsets = [0, 1, 0, 0], sizes = [2, 1, 8, 32], strides = [1, 1, 1, 1]} : vector<2x4x8x32xbf16> to vector<2x1x8x32xbf16>
    %4 = vector.shape_cast %3 : vector<2x1x8x32xbf16> to vector<2x8x32xbf16>
    %5 = vector.extract_strided_slice %0 {offsets = [0, 2, 0, 0], sizes = [2, 1, 8, 32], strides = [1, 1, 1, 1]} : vector<2x4x8x32xbf16> to vector<2x1x8x32xbf16>
    %6 = vector.shape_cast %5 : vector<2x1x8x32xbf16> to vector<2x8x32xbf16>
    %7 = vector.extract_strided_slice %0 {offsets = [0, 3, 0, 0], sizes = [2, 1, 8, 32], strides = [1, 1, 1, 1]} : vector<2x4x8x32xbf16> to vector<2x1x8x32xbf16>
    %8 = vector.shape_cast %7 : vector<2x1x8x32xbf16> to vector<2x8x32xbf16>
    %cst = arith.constant 0.000000e+00 : bf16
    %9 = vector.broadcast %cst : bf16 to vector<2x1x32xbf16>
    %10 = vector.extract_strided_slice %8 {offsets = [0, 0, 0], sizes = [2, 7, 32], strides = [1, 1, 1]} : vector<2x8x32xbf16> to vector<2x7x32xbf16>
    %11 = tpu.concatenate %9, %10 in 1 : vector<2x1x32xbf16>, vector<2x7x32xbf16> -> vector<2x8x32xbf16>
    %12 = vector.extract_strided_slice %2 {offsets = [0, 1, 0], sizes = [2, 7, 32], strides = [1, 1, 1]} : vector<2x8x32xbf16> to vector<2x7x32xbf16>
    %13 = tpu.concatenate %12, %9 in 1 : vector<2x7x32xbf16>, vector<2x1x32xbf16> -> vector<2x8x32xbf16>
    %c0_3 = arith.constant 0 : index
    %c0_4 = arith.constant 0 : index
    %14 = vector.load %arg3[%c0_3, %c0_4] : memref<1x128xf32, #tpu.memory_space<vmem>>, vector<1x128xf32>
    %15 = vector.shape_cast %11 : vector<2x8x32xbf16> to vector<16x32xbf16>
    %16 = vector.shape_cast %2 : vector<2x8x32xbf16> to vector<16x32xbf16>
    %17 = vector.shape_cast %4 : vector<2x8x32xbf16> to vector<16x32xbf16>
    %18 = vector.shape_cast %6 : vector<2x8x32xbf16> to vector<16x32xbf16>
    %c0_5 = arith.constant 0 : index
    %c0_6 = arith.constant 0 : index
    %c0_7 = arith.constant 0 : index
    %19 = vector.load %arg2[%c0_5, %c0_6, %c0_7] : memref<3x32x256xbf16, #tpu.memory_space<vmem>>, vector<1x32x256xbf16>
    %20 = vector.shape_cast %19 : vector<1x32x256xbf16> to vector<32x256xbf16>
    %cst_8 = arith.constant dense<0.000000e+00> : vector<16x256xf32>
    %21 = tpu.matmul %15, %20, %cst_8 {dimension_numbers = #tpu.dot_dimension_numbers<[1], [0], [0], [1], [0, 0, 1, 1], [], []>} : vector<16x32xbf16>, vector<32x256xbf16>, vector<16x256xf32> -> vector<16x256xf32>
    %c1 = arith.constant 1 : index
    %c0_9 = arith.constant 0 : index
    %c0_10 = arith.constant 0 : index
    %22 = vector.load %arg2[%c1, %c0_9, %c0_10] : memref<3x32x256xbf16, #tpu.memory_space<vmem>>, vector<1x32x256xbf16>
    %23 = vector.shape_cast %22 : vector<1x32x256xbf16> to vector<32x256xbf16>
    %cst_11 = arith.constant dense<0.000000e+00> : vector<16x256xf32>
    %24 = tpu.matmul %16, %23, %cst_11 {dimension_numbers = #tpu.dot_dimension_numbers<[1], [0], [0], [1], [0, 0, 1, 1], [], []>} : vector<16x32xbf16>, vector<32x256xbf16>, vector<16x256xf32> -> vector<16x256xf32>
    %25 = arith.addf %21, %24 : vector<16x256xf32>
    %c2 = arith.constant 2 : index
    %c0_12 = arith.constant 0 : index
    %c0_13 = arith.constant 0 : index
    %26 = vector.load %arg2[%c2, %c0_12, %c0_13] : memref<3x32x256xbf16, #tpu.memory_space<vmem>>, vector<1x32x256xbf16>
    %27 = vector.shape_cast %26 : vector<1x32x256xbf16> to vector<32x256xbf16>
    %cst_14 = arith.constant dense<0.000000e+00> : vector<16x256xf32>
    %28 = tpu.matmul %17, %27, %cst_14 {dimension_numbers = #tpu.dot_dimension_numbers<[1], [0], [0], [1], [0, 0, 1, 1], [], []>} : vector<16x32xbf16>, vector<32x256xbf16>, vector<16x256xf32> -> vector<16x256xf32>
    %29 = arith.addf %25, %28 : vector<16x256xf32>
    %c0_15 = arith.constant 0 : index
    %c0_16 = arith.constant 0 : index
    %c0_17 = arith.constant 0 : index
    %30 = vector.load %arg2[%c0_15, %c0_16, %c0_17] : memref<3x32x256xbf16, #tpu.memory_space<vmem>>, vector<1x32x256xbf16>
    %31 = vector.shape_cast %30 : vector<1x32x256xbf16> to vector<32x256xbf16>
    %cst_18 = arith.constant dense<0.000000e+00> : vector<16x256xf32>
    %32 = tpu.matmul %16, %31, %cst_18 {dimension_numbers = #tpu.dot_dimension_numbers<[1], [0], [0], [1], [0, 0, 1, 1], [], []>} : vector<16x32xbf16>, vector<32x256xbf16>, vector<16x256xf32> -> vector<16x256xf32>
    %c1_19 = arith.constant 1 : index
    %c0_20 = arith.constant 0 : index
    %c0_21 = arith.constant 0 : index
    %33 = vector.load %arg2[%c1_19, %c0_20, %c0_21] : memref<3x32x256xbf16, #tpu.memory_space<vmem>>, vector<1x32x256xbf16>
    %34 = vector.shape_cast %33 : vector<1x32x256xbf16> to vector<32x256xbf16>
    %cst_22 = arith.constant dense<0.000000e+00> : vector<16x256xf32>
    %35 = tpu.matmul %17, %34, %cst_22 {dimension_numbers = #tpu.dot_dimension_numbers<[1], [0], [0], [1], [0, 0, 1, 1], [], []>} : vector<16x32xbf16>, vector<32x256xbf16>, vector<16x256xf32> -> vector<16x256xf32>
    %36 = arith.addf %32, %35 : vector<16x256xf32>
    %c2_23 = arith.constant 2 : index
    %c0_24 = arith.constant 0 : index
    %c0_25 = arith.constant 0 : index
    %37 = vector.load %arg2[%c2_23, %c0_24, %c0_25] : memref<3x32x256xbf16, #tpu.memory_space<vmem>>, vector<1x32x256xbf16>
    %38 = vector.shape_cast %37 : vector<1x32x256xbf16> to vector<32x256xbf16>
    %cst_26 = arith.constant dense<0.000000e+00> : vector<16x256xf32>
    %39 = tpu.matmul %18, %38, %cst_26 {dimension_numbers = #tpu.dot_dimension_numbers<[1], [0], [0], [1], [0, 0, 1, 1], [], []>} : vector<16x32xbf16>, vector<32x256xbf16>, vector<16x256xf32> -> vector<16x256xf32>
    %40 = arith.addf %36, %39 : vector<16x256xf32>
    %41 = arith.maximumf %29, %40 : vector<16x256xf32>
    %42 = vector.extract_strided_slice %41 {offsets = [0, 0], sizes = [16, 128], strides = [1, 1]} : vector<16x256xf32> to vector<16x128xf32>
    %43 = vector.extract_strided_slice %41 {offsets = [0, 128], sizes = [16, 128], strides = [1, 1]} : vector<16x256xf32> to vector<16x128xf32>
    %44 = arith.maximumf %42, %43 : vector<16x128xf32>
    %45 = vector.broadcast %14 : vector<1x128xf32> to vector<16x128xf32>
    %46 = arith.addf %44, %45 : vector<16x128xf32>
    %cst_27 = arith.constant 0.000000e+00 : f32
    %47 = vector.broadcast %cst_27 : f32 to vector<16x128xf32>
    %48 = arith.maximumf %46, %47 : vector<16x128xf32>
    %c0_28 = arith.constant 0 : index
    %c0_29 = arith.constant 0 : index
    %49 = vector.load %arg3[%c0_28, %c0_29] : memref<1x128xf32, #tpu.memory_space<vmem>>, vector<1x128xf32>
    %50 = vector.shape_cast %4 : vector<2x8x32xbf16> to vector<16x32xbf16>
    %51 = vector.shape_cast %6 : vector<2x8x32xbf16> to vector<16x32xbf16>
    %52 = vector.shape_cast %8 : vector<2x8x32xbf16> to vector<16x32xbf16>
    %53 = vector.shape_cast %13 : vector<2x8x32xbf16> to vector<16x32xbf16>
    %c0_30 = arith.constant 0 : index
    %c0_31 = arith.constant 0 : index
    %c0_32 = arith.constant 0 : index
    %54 = vector.load %arg2[%c0_30, %c0_31, %c0_32] : memref<3x32x256xbf16, #tpu.memory_space<vmem>>, vector<1x32x256xbf16>
    %55 = vector.shape_cast %54 : vector<1x32x256xbf16> to vector<32x256xbf16>
    %cst_33 = arith.constant dense<0.000000e+00> : vector<16x256xf32>
    %56 = tpu.matmul %50, %55, %cst_33 {dimension_numbers = #tpu.dot_dimension_numbers<[1], [0], [0], [1], [0, 0, 1, 1], [], []>} : vector<16x32xbf16>, vector<32x256xbf16>, vector<16x256xf32> -> vector<16x256xf32>
    %c1_34 = arith.constant 1 : index
    %c0_35 = arith.constant 0 : index
    %c0_36 = arith.constant 0 : index
    %57 = vector.load %arg2[%c1_34, %c0_35, %c0_36] : memref<3x32x256xbf16, #tpu.memory_space<vmem>>, vector<1x32x256xbf16>
    %58 = vector.shape_cast %57 : vector<1x32x256xbf16> to vector<32x256xbf16>
    %cst_37 = arith.constant dense<0.000000e+00> : vector<16x256xf32>
    %59 = tpu.matmul %51, %58, %cst_37 {dimension_numbers = #tpu.dot_dimension_numbers<[1], [0], [0], [1], [0, 0, 1, 1], [], []>} : vector<16x32xbf16>, vector<32x256xbf16>, vector<16x256xf32> -> vector<16x256xf32>
    %60 = arith.addf %56, %59 : vector<16x256xf32>
    %c2_38 = arith.constant 2 : index
    %c0_39 = arith.constant 0 : index
    %c0_40 = arith.constant 0 : index
    %61 = vector.load %arg2[%c2_38, %c0_39, %c0_40] : memref<3x32x256xbf16, #tpu.memory_space<vmem>>, vector<1x32x256xbf16>
    %62 = vector.shape_cast %61 : vector<1x32x256xbf16> to vector<32x256xbf16>
    %cst_41 = arith.constant dense<0.000000e+00> : vector<16x256xf32>
    %63 = tpu.matmul %52, %62, %cst_41 {dimension_numbers = #tpu.dot_dimension_numbers<[1], [0], [0], [1], [0, 0, 1, 1], [], []>} : vector<16x32xbf16>, vector<32x256xbf16>, vector<16x256xf32> -> vector<16x256xf32>
    %64 = arith.addf %60, %63 : vector<16x256xf32>
    %c0_42 = arith.constant 0 : index
    %c0_43 = arith.constant 0 : index
    %c0_44 = arith.constant 0 : index
    %65 = vector.load %arg2[%c0_42, %c0_43, %c0_44] : memref<3x32x256xbf16, #tpu.memory_space<vmem>>, vector<1x32x256xbf16>
    %66 = vector.shape_cast %65 : vector<1x32x256xbf16> to vector<32x256xbf16>
    %cst_45 = arith.constant dense<0.000000e+00> : vector<16x256xf32>
    %67 = tpu.matmul %51, %66, %cst_45 {dimension_numbers = #tpu.dot_dimension_numbers<[1], [0], [0], [1], [0, 0, 1, 1], [], []>} : vector<16x32xbf16>, vector<32x256xbf16>, vector<16x256xf32> -> vector<16x256xf32>
    %c1_46 = arith.constant 1 : index
    %c0_47 = arith.constant 0 : index
    %c0_48 = arith.constant 0 : index
    %68 = vector.load %arg2[%c1_46, %c0_47, %c0_48] : memref<3x32x256xbf16, #tpu.memory_space<vmem>>, vector<1x32x256xbf16>
    %69 = vector.shape_cast %68 : vector<1x32x256xbf16> to vector<32x256xbf16>
    %cst_49 = arith.constant dense<0.000000e+00> : vector<16x256xf32>
    %70 = tpu.matmul %52, %69, %cst_49 {dimension_numbers = #tpu.dot_dimension_numbers<[1], [0], [0], [1], [0, 0, 1, 1], [], []>} : vector<16x32xbf16>, vector<32x256xbf16>, vector<16x256xf32> -> vector<16x256xf32>
    %71 = arith.addf %67, %70 : vector<16x256xf32>
    %c2_50 = arith.constant 2 : index
    %c0_51 = arith.constant 0 : index
    %c0_52 = arith.constant 0 : index
    %72 = vector.load %arg2[%c2_50, %c0_51, %c0_52] : memref<3x32x256xbf16, #tpu.memory_space<vmem>>, vector<1x32x256xbf16>
    %73 = vector.shape_cast %72 : vector<1x32x256xbf16> to vector<32x256xbf16>
    %cst_53 = arith.constant dense<0.000000e+00> : vector<16x256xf32>
    %74 = tpu.matmul %53, %73, %cst_53 {dimension_numbers = #tpu.dot_dimension_numbers<[1], [0], [0], [1], [0, 0, 1, 1], [], []>} : vector<16x32xbf16>, vector<32x256xbf16>, vector<16x256xf32> -> vector<16x256xf32>
    %75 = arith.addf %71, %74 : vector<16x256xf32>
    %76 = arith.maximumf %64, %75 : vector<16x256xf32>
    %77 = vector.extract_strided_slice %76 {offsets = [0, 0], sizes = [16, 128], strides = [1, 1]} : vector<16x256xf32> to vector<16x128xf32>
    %78 = vector.extract_strided_slice %76 {offsets = [0, 128], sizes = [16, 128], strides = [1, 1]} : vector<16x256xf32> to vector<16x128xf32>
    %79 = arith.maximumf %77, %78 : vector<16x128xf32>
    %80 = vector.broadcast %49 : vector<1x128xf32> to vector<16x128xf32>
    %81 = arith.addf %79, %80 : vector<16x128xf32>
    %cst_54 = arith.constant 0.000000e+00 : f32
    %82 = vector.broadcast %cst_54 : f32 to vector<16x128xf32>
    %83 = arith.maximumf %81, %82 : vector<16x128xf32>
    %84 = vector.shape_cast %48 : vector<16x128xf32> to vector<2x8x128xf32>
    %85 = arith.truncf %84 : vector<2x8x128xf32> to vector<2x8x128xbf16>
    %86 = vector.shape_cast %83 : vector<16x128xf32> to vector<2x8x128xf32>
    %87 = arith.truncf %86 : vector<2x8x128xf32> to vector<2x8x128xbf16>
    %cst_55 = arith.constant 0.000000e+00 : bf16
    %88 = vector.broadcast %cst_55 : bf16 to vector<2x1x128xbf16>
    %89 = vector.extract_strided_slice %87 {offsets = [0, 0, 0], sizes = [2, 7, 128], strides = [1, 1, 1]} : vector<2x8x128xbf16> to vector<2x7x128xbf16>
    %90 = tpu.concatenate %88, %89 in 1 : vector<2x1x128xbf16>, vector<2x7x128xbf16> -> vector<2x8x128xbf16>
    %91 = vector.extract_strided_slice %85 {offsets = [0, 1, 0], sizes = [2, 7, 128], strides = [1, 1, 1]} : vector<2x8x128xbf16> to vector<2x7x128xbf16>
    %92 = tpu.concatenate %91, %88 in 1 : vector<2x7x128xbf16>, vector<2x1x128xbf16> -> vector<2x8x128xbf16>
    %c0_56 = arith.constant 0 : index
    %c0_57 = arith.constant 0 : index
    %93 = vector.load %arg5[%c0_56, %c0_57] : memref<1x128xf32, #tpu.memory_space<vmem>>, vector<1x128xf32>
    %94 = vector.shape_cast %90 : vector<2x8x128xbf16> to vector<16x128xbf16>
    %95 = vector.shape_cast %85 : vector<2x8x128xbf16> to vector<16x128xbf16>
    %96 = vector.shape_cast %87 : vector<2x8x128xbf16> to vector<16x128xbf16>
    %97 = vector.shape_cast %92 : vector<2x8x128xbf16> to vector<16x128xbf16>
    %c0_58 = arith.constant 0 : index
    %c0_59 = arith.constant 0 : index
    %c0_60 = arith.constant 0 : index
    %98 = vector.load %arg4[%c0_58, %c0_59, %c0_60] : memref<3x128x256xbf16, #tpu.memory_space<vmem>>, vector<1x128x256xbf16>
    %99 = vector.shape_cast %98 : vector<1x128x256xbf16> to vector<128x256xbf16>
    %cst_61 = arith.constant dense<0.000000e+00> : vector<16x256xf32>
    %100 = tpu.matmul %94, %99, %cst_61 {dimension_numbers = #tpu.dot_dimension_numbers<[1], [0], [0], [1], [0, 0, 1, 1], [], []>} : vector<16x128xbf16>, vector<128x256xbf16>, vector<16x256xf32> -> vector<16x256xf32>
    %c1_62 = arith.constant 1 : index
    %c0_63 = arith.constant 0 : index
    %c0_64 = arith.constant 0 : index
    %101 = vector.load %arg4[%c1_62, %c0_63, %c0_64] : memref<3x128x256xbf16, #tpu.memory_space<vmem>>, vector<1x128x256xbf16>
    %102 = vector.shape_cast %101 : vector<1x128x256xbf16> to vector<128x256xbf16>
    %cst_65 = arith.constant dense<0.000000e+00> : vector<16x256xf32>
    %103 = tpu.matmul %95, %102, %cst_65 {dimension_numbers = #tpu.dot_dimension_numbers<[1], [0], [0], [1], [0, 0, 1, 1], [], []>} : vector<16x128xbf16>, vector<128x256xbf16>, vector<16x256xf32> -> vector<16x256xf32>
    %104 = arith.addf %100, %103 : vector<16x256xf32>
    %c2_66 = arith.constant 2 : index
    %c0_67 = arith.constant 0 : index
    %c0_68 = arith.constant 0 : index
    %105 = vector.load %arg4[%c2_66, %c0_67, %c0_68] : memref<3x128x256xbf16, #tpu.memory_space<vmem>>, vector<1x128x256xbf16>
    %106 = vector.shape_cast %105 : vector<1x128x256xbf16> to vector<128x256xbf16>
    %cst_69 = arith.constant dense<0.000000e+00> : vector<16x256xf32>
    %107 = tpu.matmul %96, %106, %cst_69 {dimension_numbers = #tpu.dot_dimension_numbers<[1], [0], [0], [1], [0, 0, 1, 1], [], []>} : vector<16x128xbf16>, vector<128x256xbf16>, vector<16x256xf32> -> vector<16x256xf32>
    %108 = arith.addf %104, %107 : vector<16x256xf32>
    %c0_70 = arith.constant 0 : index
    %c0_71 = arith.constant 0 : index
    %c0_72 = arith.constant 0 : index
    %109 = vector.load %arg4[%c0_70, %c0_71, %c0_72] : memref<3x128x256xbf16, #tpu.memory_space<vmem>>, vector<1x128x256xbf16>
    %110 = vector.shape_cast %109 : vector<1x128x256xbf16> to vector<128x256xbf16>
    %cst_73 = arith.constant dense<0.000000e+00> : vector<16x256xf32>
    %111 = tpu.matmul %95, %110, %cst_73 {dimension_numbers = #tpu.dot_dimension_numbers<[1], [0], [0], [1], [0, 0, 1, 1], [], []>} : vector<16x128xbf16>, vector<128x256xbf16>, vector<16x256xf32> -> vector<16x256xf32>
    %c1_74 = arith.constant 1 : index
    %c0_75 = arith.constant 0 : index
    %c0_76 = arith.constant 0 : index
    %112 = vector.load %arg4[%c1_74, %c0_75, %c0_76] : memref<3x128x256xbf16, #tpu.memory_space<vmem>>, vector<1x128x256xbf16>
    %113 = vector.shape_cast %112 : vector<1x128x256xbf16> to vector<128x256xbf16>
    %cst_77 = arith.constant dense<0.000000e+00> : vector<16x256xf32>
    %114 = tpu.matmul %96, %113, %cst_77 {dimension_numbers = #tpu.dot_dimension_numbers<[1], [0], [0], [1], [0, 0, 1, 1], [], []>} : vector<16x128xbf16>, vector<128x256xbf16>, vector<16x256xf32> -> vector<16x256xf32>
    %115 = arith.addf %111, %114 : vector<16x256xf32>
    %c2_78 = arith.constant 2 : index
    %c0_79 = arith.constant 0 : index
    %c0_80 = arith.constant 0 : index
    %116 = vector.load %arg4[%c2_78, %c0_79, %c0_80] : memref<3x128x256xbf16, #tpu.memory_space<vmem>>, vector<1x128x256xbf16>
    %117 = vector.shape_cast %116 : vector<1x128x256xbf16> to vector<128x256xbf16>
    %cst_81 = arith.constant dense<0.000000e+00> : vector<16x256xf32>
    %118 = tpu.matmul %97, %117, %cst_81 {dimension_numbers = #tpu.dot_dimension_numbers<[1], [0], [0], [1], [0, 0, 1, 1], [], []>} : vector<16x128xbf16>, vector<128x256xbf16>, vector<16x256xf32> -> vector<16x256xf32>
    %119 = arith.addf %115, %118 : vector<16x256xf32>
    %120 = arith.maximumf %108, %119 : vector<16x256xf32>
    %121 = vector.extract_strided_slice %120 {offsets = [0, 0], sizes = [16, 128], strides = [1, 1]} : vector<16x256xf32> to vector<16x128xf32>
    %122 = vector.extract_strided_slice %120 {offsets = [0, 128], sizes = [16, 128], strides = [1, 1]} : vector<16x256xf32> to vector<16x128xf32>
    %123 = arith.maximumf %121, %122 : vector<16x128xf32>
    %124 = vector.broadcast %93 : vector<1x128xf32> to vector<16x128xf32>
    %125 = arith.addf %123, %124 : vector<16x128xf32>
    %cst_82 = arith.constant 0.000000e+00 : f32
    %126 = vector.broadcast %cst_82 : f32 to vector<16x128xf32>
    %127 = arith.maximumf %125, %126 : vector<16x128xf32>
    %128 = vector.shape_cast %127 : vector<16x128xf32> to vector<2x8x128xf32>
    %129 = arith.truncf %128 : vector<2x8x128xf32> to vector<2x8x128xbf16>
    %130 = vector.extract_strided_slice %129 {offsets = [0, 0, 0], sizes = [2, 1, 128], strides = [1, 1, 1]} : vector<2x8x128xbf16> to vector<2x1x128xbf16>
    %131 = vector.shape_cast %130 : vector<2x1x128xbf16> to vector<2x128xbf16>
    %c0_83 = arith.constant 0 : index
    %c0_84 = arith.constant 0 : index
    %c0_85 = arith.constant 0 : index
    %132 = vector.load %arg6[%c0_83, %c0_84, %c0_85] : memref<8x128x32xbf16, #tpu.memory_space<vmem>>, vector<1x128x32xbf16>
    %133 = vector.shape_cast %132 : vector<1x128x32xbf16> to vector<128x32xbf16>
    %cst_86 = arith.constant dense<0.000000e+00> : vector<2x32xf32>
    %134 = tpu.matmul %131, %133, %cst_86 {dimension_numbers = #tpu.dot_dimension_numbers<[1], [0], [0], [1], [0, 0, 1, 1], [], []>} : vector<2x128xbf16>, vector<128x32xbf16>, vector<2x32xf32> -> vector<2x32xf32>
    %135 = vector.extract_strided_slice %129 {offsets = [0, 1, 0], sizes = [2, 1, 128], strides = [1, 1, 1]} : vector<2x8x128xbf16> to vector<2x1x128xbf16>
    %136 = vector.shape_cast %135 : vector<2x1x128xbf16> to vector<2x128xbf16>
    %c1_87 = arith.constant 1 : index
    %c0_88 = arith.constant 0 : index
    %c0_89 = arith.constant 0 : index
    %137 = vector.load %arg6[%c1_87, %c0_88, %c0_89] : memref<8x128x32xbf16, #tpu.memory_space<vmem>>, vector<1x128x32xbf16>
    %138 = vector.shape_cast %137 : vector<1x128x32xbf16> to vector<128x32xbf16>
    %cst_90 = arith.constant dense<0.000000e+00> : vector<2x32xf32>
    %139 = tpu.matmul %136, %138, %cst_90 {dimension_numbers = #tpu.dot_dimension_numbers<[1], [0], [0], [1], [0, 0, 1, 1], [], []>} : vector<2x128xbf16>, vector<128x32xbf16>, vector<2x32xf32> -> vector<2x32xf32>
    %140 = arith.addf %134, %139 : vector<2x32xf32>
    %141 = vector.extract_strided_slice %129 {offsets = [0, 2, 0], sizes = [2, 1, 128], strides = [1, 1, 1]} : vector<2x8x128xbf16> to vector<2x1x128xbf16>
    %142 = vector.shape_cast %141 : vector<2x1x128xbf16> to vector<2x128xbf16>
    %c2_91 = arith.constant 2 : index
    %c0_92 = arith.constant 0 : index
    %c0_93 = arith.constant 0 : index
    %143 = vector.load %arg6[%c2_91, %c0_92, %c0_93] : memref<8x128x32xbf16, #tpu.memory_space<vmem>>, vector<1x128x32xbf16>
    %144 = vector.shape_cast %143 : vector<1x128x32xbf16> to vector<128x32xbf16>
    %cst_94 = arith.constant dense<0.000000e+00> : vector<2x32xf32>
    %145 = tpu.matmul %142, %144, %cst_94 {dimension_numbers = #tpu.dot_dimension_numbers<[1], [0], [0], [1], [0, 0, 1, 1], [], []>} : vector<2x128xbf16>, vector<128x32xbf16>, vector<2x32xf32> -> vector<2x32xf32>
    %146 = arith.addf %140, %145 : vector<2x32xf32>
    %147 = vector.extract_strided_slice %129 {offsets = [0, 3, 0], sizes = [2, 1, 128], strides = [1, 1, 1]} : vector<2x8x128xbf16> to vector<2x1x128xbf16>
    %148 = vector.shape_cast %147 : vector<2x1x128xbf16> to vector<2x128xbf16>
    %c3 = arith.constant 3 : index
    %c0_95 = arith.constant 0 : index
    %c0_96 = arith.constant 0 : index
    %149 = vector.load %arg6[%c3, %c0_95, %c0_96] : memref<8x128x32xbf16, #tpu.memory_space<vmem>>, vector<1x128x32xbf16>
    %150 = vector.shape_cast %149 : vector<1x128x32xbf16> to vector<128x32xbf16>
    %cst_97 = arith.constant dense<0.000000e+00> : vector<2x32xf32>
    %151 = tpu.matmul %148, %150, %cst_97 {dimension_numbers = #tpu.dot_dimension_numbers<[1], [0], [0], [1], [0, 0, 1, 1], [], []>} : vector<2x128xbf16>, vector<128x32xbf16>, vector<2x32xf32> -> vector<2x32xf32>
    %152 = arith.addf %146, %151 : vector<2x32xf32>
    %153 = vector.extract_strided_slice %129 {offsets = [0, 4, 0], sizes = [2, 1, 128], strides = [1, 1, 1]} : vector<2x8x128xbf16> to vector<2x1x128xbf16>
    %154 = vector.shape_cast %153 : vector<2x1x128xbf16> to vector<2x128xbf16>
    %c4 = arith.constant 4 : index
    %c0_98 = arith.constant 0 : index
    %c0_99 = arith.constant 0 : index
    %155 = vector.load %arg6[%c4, %c0_98, %c0_99] : memref<8x128x32xbf16, #tpu.memory_space<vmem>>, vector<1x128x32xbf16>
    %156 = vector.shape_cast %155 : vector<1x128x32xbf16> to vector<128x32xbf16>
    %cst_100 = arith.constant dense<0.000000e+00> : vector<2x32xf32>
    %157 = tpu.matmul %154, %156, %cst_100 {dimension_numbers = #tpu.dot_dimension_numbers<[1], [0], [0], [1], [0, 0, 1, 1], [], []>} : vector<2x128xbf16>, vector<128x32xbf16>, vector<2x32xf32> -> vector<2x32xf32>
    %158 = arith.addf %152, %157 : vector<2x32xf32>
    %159 = vector.extract_strided_slice %129 {offsets = [0, 5, 0], sizes = [2, 1, 128], strides = [1, 1, 1]} : vector<2x8x128xbf16> to vector<2x1x128xbf16>
    %160 = vector.shape_cast %159 : vector<2x1x128xbf16> to vector<2x128xbf16>
    %c5 = arith.constant 5 : index
    %c0_101 = arith.constant 0 : index
    %c0_102 = arith.constant 0 : index
    %161 = vector.load %arg6[%c5, %c0_101, %c0_102] : memref<8x128x32xbf16, #tpu.memory_space<vmem>>, vector<1x128x32xbf16>
    %162 = vector.shape_cast %161 : vector<1x128x32xbf16> to vector<128x32xbf16>
    %cst_103 = arith.constant dense<0.000000e+00> : vector<2x32xf32>
    %163 = tpu.matmul %160, %162, %cst_103 {dimension_numbers = #tpu.dot_dimension_numbers<[1], [0], [0], [1], [0, 0, 1, 1], [], []>} : vector<2x128xbf16>, vector<128x32xbf16>, vector<2x32xf32> -> vector<2x32xf32>
    %164 = arith.addf %158, %163 : vector<2x32xf32>
    %165 = vector.extract_strided_slice %129 {offsets = [0, 6, 0], sizes = [2, 1, 128], strides = [1, 1, 1]} : vector<2x8x128xbf16> to vector<2x1x128xbf16>
    %166 = vector.shape_cast %165 : vector<2x1x128xbf16> to vector<2x128xbf16>
    %c6 = arith.constant 6 : index
    %c0_104 = arith.constant 0 : index
    %c0_105 = arith.constant 0 : index
    %167 = vector.load %arg6[%c6, %c0_104, %c0_105] : memref<8x128x32xbf16, #tpu.memory_space<vmem>>, vector<1x128x32xbf16>
    %168 = vector.shape_cast %167 : vector<1x128x32xbf16> to vector<128x32xbf16>
    %cst_106 = arith.constant dense<0.000000e+00> : vector<2x32xf32>
    %169 = tpu.matmul %166, %168, %cst_106 {dimension_numbers = #tpu.dot_dimension_numbers<[1], [0], [0], [1], [0, 0, 1, 1], [], []>} : vector<2x128xbf16>, vector<128x32xbf16>, vector<2x32xf32> -> vector<2x32xf32>
    %170 = arith.addf %164, %169 : vector<2x32xf32>
    %171 = vector.extract_strided_slice %129 {offsets = [0, 7, 0], sizes = [2, 1, 128], strides = [1, 1, 1]} : vector<2x8x128xbf16> to vector<2x1x128xbf16>
    %172 = vector.shape_cast %171 : vector<2x1x128xbf16> to vector<2x128xbf16>
    %c7 = arith.constant 7 : index
    %c0_107 = arith.constant 0 : index
    %c0_108 = arith.constant 0 : index
    %173 = vector.load %arg6[%c7, %c0_107, %c0_108] : memref<8x128x32xbf16, #tpu.memory_space<vmem>>, vector<1x128x32xbf16>
    %174 = vector.shape_cast %173 : vector<1x128x32xbf16> to vector<128x32xbf16>
    %cst_109 = arith.constant dense<0.000000e+00> : vector<2x32xf32>
    %175 = tpu.matmul %172, %174, %cst_109 {dimension_numbers = #tpu.dot_dimension_numbers<[1], [0], [0], [1], [0, 0, 1, 1], [], []>} : vector<2x128xbf16>, vector<128x32xbf16>, vector<2x32xf32> -> vector<2x32xf32>
    %176 = arith.addf %170, %175 : vector<2x32xf32>
    %c0_110 = arith.constant 0 : index
    %c0_111 = arith.constant 0 : index
    %177 = vector.load %arg7[%c0_110, %c0_111] : memref<1x32xf32, #tpu.memory_space<vmem>>, vector<1x32xf32>
    %178 = vector.broadcast %177 : vector<1x32xf32> to vector<2x32xf32>
    %179 = arith.addf %176, %178 : vector<2x32xf32>
    %cst_112 = arith.constant 0.000000e+00 : f32
    %180 = vector.broadcast %cst_112 : f32 to vector<2x32xf32>
    %181 = arith.maximumf %179, %180 : vector<2x32xf32>
    %c0_113 = arith.constant 0 : index
    %c0_114 = arith.constant 0 : index
    %182 = vector.load %arg8[%c0_113, %c0_114] : memref<32x1xf32, #tpu.memory_space<vmem>>, vector<32x1xf32>
    %cst_115 = arith.constant dense<0.000000e+00> : vector<2x1xf32>
    %183 = tpu.matmul %181, %182, %cst_115 {dimension_numbers = #tpu.dot_dimension_numbers<[1], [0], [0], [1], [0, 0, 1, 1], [], []>} : vector<2x32xf32>, vector<32x1xf32>, vector<2x1xf32> -> vector<2x1xf32>
    %c0_116 = arith.constant 0 : index
    %c0_117 = arith.constant 0 : index
    %184 = vector.load %arg9[%c0_116, %c0_117] : memref<1x1xf32, #tpu.memory_space<vmem>>, vector<1x1xf32>
    %185 = vector.broadcast %184 : vector<1x1xf32> to vector<2x1xf32>
    %186 = arith.addf %183, %185 : vector<2x1xf32>
    %c0_118 = arith.constant 0 : index
    %c0_119 = arith.constant 0 : index
    %187 = vector.load %arg10[%c0_118, %c0_119] : memref<2x1xf32, #tpu.memory_space<vmem>>, vector<2x1xf32>
    tpu.vector_store %arg10[%c0_118, %c0_119], %186 {strides = array<i32>} : memref<2x1xf32, #tpu.memory_space<vmem>>, vector<2x1xf32>,
    return
  }
  func.func @transform_0(%arg0: i32) -> (i32, i32, i32, i32) {
    %c0_i32 = arith.constant 0 : i32
    %c0_i32_0 = arith.constant 0 : i32
    %c0_i32_1 = arith.constant 0 : i32
    %c0_i32_2 = arith.constant 0 : i32
    return %arg0, %c0_i32, %c0_i32_0, %c0_i32_1 : i32, i32, i32, i32
  }
  func.func @transform_1(%arg0: i32) -> (i32, i32, i32) {
    %c0_i32 = arith.constant 0 : i32
    %c0_i32_0 = arith.constant 0 : i32
    %c0_i32_1 = arith.constant 0 : i32
    %c0_i32_2 = arith.constant 0 : i32
    return %c0_i32, %c0_i32_0, %c0_i32_1 : i32, i32, i32
  }
  func.func @transform_2(%arg0: i32) -> (i32, i32) {
    %c0_i32 = arith.constant 0 : i32
    %c0_i32_0 = arith.constant 0 : i32
    %c0_i32_1 = arith.constant 0 : i32
    return %c0_i32, %c0_i32_0 : i32, i32
  }
  func.func @transform_3(%arg0: i32) -> (i32, i32, i32) {
    %c0_i32 = arith.constant 0 : i32
    %c0_i32_0 = arith.constant 0 : i32
    %c0_i32_1 = arith.constant 0 : i32
    %c0_i32_2 = arith.constant 0 : i32
    return %c0_i32, %c0_i32_0, %c0_i32_1 : i32, i32, i32
  }
  func.func @transform_4(%arg0: i32) -> (i32, i32) {
    %c0_i32 = arith.constant 0 : i32
    %c0_i32_0 = arith.constant 0 : i32
    %c0_i32_1 = arith.constant 0 : i32
    return %c0_i32, %c0_i32_0 : i32, i32
  }
  func.func @transform_5(%arg0: i32) -> (i32, i32, i32) {
    %c0_i32 = arith.constant 0 : i32
    %c0_i32_0 = arith.constant 0 : i32
    %c0_i32_1 = arith.constant 0 : i32
    %c0_i32_2 = arith.constant 0 : i32
    return %c0_i32, %c0_i32_0, %c0_i32_1 : i32, i32, i32
  }
  func.func @transform_6(%arg0: i32) -> (i32, i32) {
    %c0_i32 = arith.constant 0 : i32
    %c0_i32_0 = arith.constant 0 : i32
    %c0_i32_1 = arith.constant 0 : i32
    return %c0_i32, %c0_i32_0 : i32, i32
  }
  func.func @transform_7(%arg0: i32) -> (i32, i32) {
    %c0_i32 = arith.constant 0 : i32
    %c0_i32_0 = arith.constant 0 : i32
    %c0_i32_1 = arith.constant 0 : i32
    return %c0_i32, %c0_i32_0 : i32, i32
  }
  func.func @transform_8(%arg0: i32) -> (i32, i32) {
    %c0_i32 = arith.constant 0 : i32
    %c0_i32_0 = arith.constant 0 : i32
    %c0_i32_1 = arith.constant 0 : i32
    return %c0_i32, %c0_i32_0 : i32, i32
  }
  func.func @transform_9(%arg0: i32) -> (i32, i32) {
    %c0_i32 = arith.constant 0 : i32
    %c0_i32_0 = arith.constant 0 : i32
    return %arg0, %c0_i32 : i32, i32
  }
}

</mosaic_0001>

<llo_original>
// kernel: even_shallower_cnn_forward.1
$region0: #{even_shallower_cnn_forward.1}
  #allocation0 [shape = 'u32[]', space=smem, size = 0x4, offset = 0x4, fixed_abs, tag = 'smem constant byte address 0x4 - core index']
  #allocation1 [shape = 'u32[144,128]{1,0:T(1,128)}', space=vmem, size = 0x12000, scoped, tag = 'internal scratch']
  #allocation2 [shape = 'f32[1,1]{1,0:T(1,128)S(1)}', space=vmem, size = 0x200, scoped, tag = 'scoped memory for even_shallower_cnn_forward.1']
  %s0 = inlined_call_operand.vmem [shape: bf16[2,4,8,32], index: 0, kind: input, shape index: {}]
  %s1 = inlined_call_operand.vmem [shape: bf16[3,32,256], index: 1, kind: input, shape index: {}]
  %s2 = inlined_call_operand.vmem [shape: f32[1,128], index: 2, kind: input, shape index: {}]
  %s3 = inlined_call_operand.vmem [shape: bf16[3,128,256], index: 3, kind: input, shape index: {}]
  %s4 = inlined_call_operand.vmem [shape: f32[1,128], index: 4, kind: input, shape index: {}]
  %s5 = inlined_call_operand.vmem [shape: bf16[8,128,32], index: 5, kind: input, shape index: {}]
  %s6 = inlined_call_operand.vmem [shape: f32[1,32], index: 6, kind: input, shape index: {}]
  %s7 = inlined_call_operand.vmem [shape: f32[32,1], index: 7, kind: input, shape index: {}]
  %s8 = inlined_call_operand.<no memory space> [shape: f32[1,1], index: 8, kind: input, shape index: {}]
  %s9 = inlined_call_operand.vmem [shape: f32[2,1], index: 9, kind: output, shape index: {}]
  %s10 = sld [smem:[#allocation0]]
  $region46: #{even_shallower_cnn_forward.1} parent=0
    _
  %s12 = ssub.s32 1, %s10
  %s13 = scalar_select 0, %s12, %s10
  %v14 = vstv %s8
  %15 = vst [vmem:[#allocation2] sm:$0x1] %v14
  // Predicated region
  $region2: #{even_shallower_cnn_forward.1} parent=0 // pred_check
    _
  $region3: #{even_shallower_cnn_forward.1} parent=0 // pred_check_branch
    %17 = sbr.rel (0) target = $region5
  $region4: #{even_shallower_cnn_forward.1} parent=0 // pred_region
    _
  $region5: #{even_shallower_cnn_forward.1} parent=0 // pred_fallthru
    _
  // Predicated region
  $region6: #{even_shallower_cnn_forward.1} parent=0 // pred_check
    _
  $region7: #{even_shallower_cnn_forward.1} parent=0 // pred_check_branch
    %19 = sbr.rel (0) target = $region9
  $region8: #{even_shallower_cnn_forward.1} parent=0 // pred_region
    _
  $region9: #{even_shallower_cnn_forward.1} parent=0 // pred_fallthru
    _
  // Predicated region
  $region10: #{even_shallower_cnn_forward.1} parent=0 // pred_check
    _
  $region11: #{even_shallower_cnn_forward.1} parent=0 // pred_check_branch
    %21 = sbr.rel (0) target = $region13
  $region12: #{even_shallower_cnn_forward.1} parent=0 // pred_region
    _
  $region13: #{even_shallower_cnn_forward.1} parent=0 // pred_fallthru
    _
  // Predicated region
  $region14: #{even_shallower_cnn_forward.1} parent=0 // pred_check
    _
  $region15: #{even_shallower_cnn_forward.1} parent=0 // pred_check_branch
    %23 = sbr.rel (0) target = $region17
  $region16: #{even_shallower_cnn_forward.1} parent=0 // pred_region
    _
  $region17: #{even_shallower_cnn_forward.1} parent=0 // pred_fallthru
    _
  // Predicated region
  $region18: #{even_shallower_cnn_forward.1} parent=0 // pred_check
    _
  $region19: #{even_shallower_cnn_forward.1} parent=0 // pred_check_branch
    %25 = sbr.rel (0) target = $region21
  $region20: #{even_shallower_cnn_forward.1} parent=0 // pred_region
    _
  $region21: #{even_shallower_cnn_forward.1} parent=0 // pred_fallthru
    _
  // Predicated region
  $region22: #{even_shallower_cnn_forward.1} parent=0 // pred_check
    _
  $region23: #{even_shallower_cnn_forward.1} parent=0 // pred_check_branch
    %27 = sbr.rel (0) target = $region25
  $region24: #{even_shallower_cnn_forward.1} parent=0 // pred_region
    _
  $region25: #{even_shallower_cnn_forward.1} parent=0 // pred_fallthru
    _
  // Predicated region
  $region26: #{even_shallower_cnn_forward.1} parent=0 // pred_check
    _
  $region27: #{even_shallower_cnn_forward.1} parent=0 // pred_check_branch
    %29 = sbr.rel (0) target = $region29
  $region28: #{even_shallower_cnn_forward.1} parent=0 // pred_region
    _
  $region29: #{even_shallower_cnn_forward.1} parent=0 // pred_fallthru
    _
  // Predicated region
  $region30: #{even_shallower_cnn_forward.1} parent=0 // pred_check
    _
  $region31: #{even_shallower_cnn_forward.1} parent=0 // pred_check_branch
    %31 = sbr.rel (0) target = $region33
  $region32: #{even_shallower_cnn_forward.1} parent=0 // pred_region
    _
  $region33: #{even_shallower_cnn_forward.1} parent=0 // pred_fallthru
    _
  // Predicated region
  $region34: #{even_shallower_cnn_forward.1} parent=0 // pred_check
    _
  $region35: #{even_shallower_cnn_forward.1} parent=0 // pred_check_branch
    %33 = sbr.rel (0) target = $region37
  $region36: #{even_shallower_cnn_forward.1} parent=0 // pred_region
    _
  $region37: #{even_shallower_cnn_forward.1} parent=0 // pred_fallthru
    _
  %v35 = vld [vmem:[%s0] sm:$0xf]
  %v36 = vld [vmem:[%s0 + $0x4] sm:$0xf]
  %v37 = vld [vmem:[%s0 + $0x8] sm:$0xf]
  %v38 = vld [vmem:[%s0 + $0xc] sm:$0xf]
  %v39 = vld [vmem:[%s0 + $0x10] sm:$0xf]
  %v40 = vld [vmem:[%s0 + $0x14] sm:$0xf]
  %v41 = vld [vmem:[%s0 + $0x18] sm:$0xf]
  %v42 = vld [vmem:[%s0 + $0x1c] sm:$0xf]
  %v45 = vunpack.c.l.b16 %v38
  %v46 = vunpack.c.l.b16 %v42
  %v47 = vpack.c.b16 %v45, %v45
  %v48 = vpack.c.b16 %v46, %v46
  %v50 = vshrl.u32 %v47, 16
  %v52 = vrot.slane %v50, 7
  %v53 = vshll.u32 %v47, 16
  %v55 = vor.u32 %v52, %v53
  %v57 = vshrl.u32 %v48, 16
  %v59 = vrot.slane %v57, 7
  %v60 = vshll.u32 %v48, 16
  %v62 = vor.u32 %v59, %v60
  %vm65 = vcmask 1040384
  %vm66 = vsmask.f32 256
  %vm67 = vmand %vm65, %vm66
  %v68 = vsel %vm67, 0, %v55
  %v69 = vsel %vm67, 0, %v62
  %v72 = vunpack.c.l.b16 %v35
  %v73 = vunpack.c.l.b16 %v39
  %v74 = vpack.c.b16 %v72, %v72
  %v75 = vpack.c.b16 %v73, %v73
  %v77 = vshrl.u32 %v74, 16
  %v79 = vshll.u32 %v74, 16
  %v81 = vrot.slane %v79, 1
  %v82 = vor.u32 %v77, %v81
  %v84 = vshrl.u32 %v75, 16
  %v86 = vshll.u32 %v75, 16
  %v88 = vrot.slane %v86, 1
  %v89 = vor.u32 %v84, %v88
  %vm92 = vcmask 1043456
  %vm93 = vsmask.f32 3328
  %vm94 = vmand %vm92, %vm93
  %v95 = vsel %vm94, %v82, 0
  %v96 = vsel %vm94, %v89, 0
  %v97 = vld [vmem:[%s2] sm:$0x1]
  %v98 = vld [vmem:[%s1] sm:$0xff]
  %v99 = vld [vmem:[%s1 + $0x8] sm:$0xff]
  %v100 = vld [vmem:[%s1 + $0x10] sm:$0xff]
  %v101 = vld [vmem:[%s1 + $0x18] sm:$0xff]
  %s102 = scalar_lea.vmem %s1, 32
  %v103 = vld [vmem:[%s102] sm:$0xff]
  %v104 = vld [vmem:[%s102 + $0x8] sm:$0xff]
  %v105 = vld [vmem:[%s102 + $0x10] sm:$0xff]
  %v106 = vld [vmem:[%s102 + $0x18] sm:$0xff]
  %v107 = vpack.c.b16 %v73, %v72
  %v112 = vunpack.c.l.b16 %v103
  %v113 = vunpack.c.h.b16 %v103
  %v114 = vunpack.c.l.b16 %v104
  %v115 = vunpack.c.h.b16 %v104
  %v116 = vunpack.c.l.b16 %v105
  %v117 = vunpack.c.h.b16 %v105
  %v118 = vunpack.c.l.b16 %v106
  %v119 = vunpack.c.h.b16 %v106
  %v120 = vpack.c.b16 %v114, %v112
  %v121 = vpack.c.b16 %v115, %v113
  %v122 = vpack.c.b16 %v118, %v116
  %v123 = vpack.c.b16 %v119, %v117
  %vm128 = vcmask 261120
  %v130 = vsel %vm128, %v107, 0
  %132 = vmatprep.subr.bf16.mxu0 %v121
  %133 = vmatpush1.bf16.msra.mxu0 %v120
  %134 = vmatprep.subr.bf16.mxu0 %v123
  %135 = vmatpush1.bf16.msra.mxu0 %v122
  %136 = vmatprep.subr.bf16.mxu0 0
  %137 = vmatpush1.bf16.msra.mxu0 0
  %138 = vmatprep.subr.bf16.mxu0 0
  %139 = vmatpush1.bf16.msra.mxu0 0
  %140 = vmatprep.subr.bf16.mxu0 0
  %141 = vmatpush1.bf16.msra.mxu0 0
  %142 = vmatprep.subr.bf16.mxu0 0
  %143 = vmatpush1.bf16.msra.mxu0 0
  %144 = vmatprep.subr.bf16.mxu0 0
  %145 = vmatpush1.bf16.msra.mxu0 0
  %146 = vmatprep.subr.bf16.mxu0 0
  %147 = vmatpush1.bf16.msra.mxu0 0
  %148 = vmatprep.subr.bf16.mxu0 0
  %149 = vmatpush1.bf16.msra.mxu0 0
  %150 = vmatprep.subr.bf16.mxu0 0
  %151 = vmatpush1.bf16.msra.mxu0 0
  %152 = vmatprep.subr.bf16.mxu0 0
  %153 = vmatpush1.bf16.msra.mxu0 0
  %154 = vmatprep.subr.bf16.mxu0 0
  %155 = vmatpush1.bf16.msra.mxu0 0
  %156 = vmatprep.subr.bf16.mxu0 0
  %157 = vmatpush1.bf16.msra.mxu0 0
  %158 = vmatprep.subr.bf16.mxu0 0
  %159 = vmatpush1.bf16.msra.mxu0 0
  %160 = vmatprep.subr.bf16.mxu0 0
  %161 = vmatpush1.bf16.msra.mxu0 0
  %162 = vmatprep.subr.bf16.mxu0 0
  %163 = vmatpush1.bf16.msra.mxu0 0
  %164 = vmatprep.mubr.bf16.mxu0 0
  %165 = vmatmul.mubr.bf16.gmra.mrb[0].mxu0 %v130
  %v166 = vpop.f32.mrb[0].mxu0
  %v167 = vadd.f32 0.0, %v166
  %v168 = vpop.f32.mrb[0].mxu0
  %v169 = vadd.f32 0.0, %v168
  %v170 = vpop.f32.mrb[0].mxu0
  %v171 = vadd.f32 0.0, %v170
  %v172 = vpop.f32.mrb[0].mxu0
  %v173 = vadd.f32 0.0, %v172
  %174 = vdwg.mxu0
  %v177 = vunpack.c.l.b16 %v68
  %v178 = vunpack.c.l.b16 %v69
  %v179 = vpack.c.b16 %v178, %v177
  %v184 = vunpack.c.l.b16 %v98
  %v185 = vunpack.c.h.b16 %v98
  %v186 = vunpack.c.l.b16 %v99
  %v187 = vunpack.c.h.b16 %v99
  %v188 = vunpack.c.l.b16 %v100
  %v189 = vunpack.c.h.b16 %v100
  %v190 = vunpack.c.l.b16 %v101
  %v191 = vunpack.c.h.b16 %v101
  %v192 = vpack.c.b16 %v186, %v184
  %v193 = vpack.c.b16 %v187, %v185
  %v194 = vpack.c.b16 %v190, %v188
  %v195 = vpack.c.b16 %v191, %v189
  %v201 = vsel %vm128, %v179, 0
  %203 = vmatprep.subr.bf16.mxu0 %v193
  %204 = vmatpush1.bf16.msra.mxu0 %v192
  %205 = vmatprep.subr.bf16.mxu0 %v195
  %206 = vmatpush1.bf16.msra.mxu0 %v194
  %207 = vmatprep.subr.bf16.mxu0 0
  %208 = vmatpush1.bf16.msra.mxu0 0
  %209 = vmatprep.subr.bf16.mxu0 0
  %210 = vmatpush1.bf16.msra.mxu0 0
  %211 = vmatprep.subr.bf16.mxu0 0
  %212 = vmatpush1.bf16.msra.mxu0 0
  %213 = vmatprep.subr.bf16.mxu0 0
  %214 = vmatpush1.bf16.msra.mxu0 0
  %215 = vmatprep.subr.bf16.mxu0 0
  %216 = vmatpush1.bf16.msra.mxu0 0
  %217 = vmatprep.subr.bf16.mxu0 0
  %218 = vmatpush1.bf16.msra.mxu0 0
  %219 = vmatprep.subr.bf16.mxu0 0
  %220 = vmatpush1.bf16.msra.mxu0 0
  %221 = vmatprep.subr.bf16.mxu0 0
  %222 = vmatpush1.bf16.msra.mxu0 0
  %223 = vmatprep.subr.bf16.mxu0 0
  %224 = vmatpush1.bf16.msra.mxu0 0
  %225 = vmatprep.subr.bf16.mxu0 0
  %226 = vmatpush1.bf16.msra.mxu0 0
  %227 = vmatprep.subr.bf16.mxu0 0
  %228 = vmatpush1.bf16.msra.mxu0 0
  %229 = vmatprep.subr.bf16.mxu0 0
  %230 = vmatpush1.bf16.msra.mxu0 0
  %231 = vmatprep.subr.bf16.mxu0 0
  %232 = vmatpush1.bf16.msra.mxu0 0
  %233 = vmatprep.subr.bf16.mxu0 0
  %234 = vmatpush1.bf16.msra.mxu0 0
  %235 = vmatprep.mubr.bf16.mxu0 0
  %236 = vmatmul.mubr.bf16.gmra.mrb[0].mxu0 %v201
  %v237 = vpop.f32.mrb[0].mxu0
  %v238 = vadd.f32 %v167, %v237
  %v239 = vpop.f32.mrb[0].mxu0
  %v240 = vadd.f32 %v169, %v239
  %v241 = vpop.f32.mrb[0].mxu0
  %v242 = vadd.f32 %v171, %v241
  %v243 = vpop.f32.mrb[0].mxu0
  %v244 = vadd.f32 %v173, %v243
  %245 = vdwg.mxu0
  %s246 = scalar_lea.vmem %s1, 64
  %v247 = vld [vmem:[%s246] sm:$0xff]
  %v248 = vld [vmem:[%s246 + $0x8] sm:$0xff]
  %v249 = vld [vmem:[%s246 + $0x10] sm:$0xff]
  %v250 = vld [vmem:[%s246 + $0x18] sm:$0xff]
  %v253 = vunpack.c.l.b16 %v36
  %v254 = vunpack.c.l.b16 %v40
  %v255 = vpack.c.b16 %v254, %v253
  %v260 = vunpack.c.l.b16 %v247
  %v261 = vunpack.c.h.b16 %v247
  %v262 = vunpack.c.l.b16 %v248
  %v263 = vunpack.c.h.b16 %v248
  %v264 = vunpack.c.l.b16 %v249
  %v265 = vunpack.c.h.b16 %v249
  %v266 = vunpack.c.l.b16 %v250
  %v267 = vunpack.c.h.b16 %v250
  %v268 = vpack.c.b16 %v262, %v260
  %v269 = vpack.c.b16 %v263, %v261
  %v270 = vpack.c.b16 %v266, %v264
  %v271 = vpack.c.b16 %v267, %v265
  %v277 = vsel %vm128, %v255, 0
  %279 = vmatprep.subr.bf16.mxu0 %v269
  %280 = vmatpush1.bf16.msra.mxu0 %v268
  %281 = vmatprep.subr.bf16.mxu0 %v271
  %282 = vmatpush1.bf16.msra.mxu0 %v270
  %283 = vmatprep.subr.bf16.mxu0 0
  %284 = vmatpush1.bf16.msra.mxu0 0
  %285 = vmatprep.subr.bf16.mxu0 0
  %286 = vmatpush1.bf16.msra.mxu0 0
  %287 = vmatprep.subr.bf16.mxu0 0
  %288 = vmatpush1.bf16.msra.mxu0 0
  %289 = vmatprep.subr.bf16.mxu0 0
  %290 = vmatpush1.bf16.msra.mxu0 0
  %291 = vmatprep.subr.bf16.mxu0 0
  %292 = vmatpush1.bf16.msra.mxu0 0
  %293 = vmatprep.subr.bf16.mxu0 0
  %294 = vmatpush1.bf16.msra.mxu0 0
  %295 = vmatprep.subr.bf16.mxu0 0
  %296 = vmatpush1.bf16.msra.mxu0 0
  %297 = vmatprep.subr.bf16.mxu0 0
  %298 = vmatpush1.bf16.msra.mxu0 0
  %299 = vmatprep.subr.bf16.mxu0 0
  %300 = vmatpush1.bf16.msra.mxu0 0
  %301 = vmatprep.subr.bf16.mxu0 0
  %302 = vmatpush1.bf16.msra.mxu0 0
  %303 = vmatprep.subr.bf16.mxu0 0
  %304 = vmatpush1.bf16.msra.mxu0 0
  %305 = vmatprep.subr.bf16.mxu0 0
  %306 = vmatpush1.bf16.msra.mxu0 0
  %307 = vmatprep.subr.bf16.mxu0 0
  %308 = vmatpush1.bf16.msra.mxu0 0
  %309 = vmatprep.subr.bf16.mxu0 0
  %310 = vmatpush1.bf16.msra.mxu0 0
  %311 = vmatprep.mubr.bf16.mxu0 0
  %312 = vmatmul.mubr.bf16.gmra.mrb[0].mxu0 %v277
  %v313 = vpop.f32.mrb[0].mxu0
  %v314 = vadd.f32 0.0, %v313
  %v315 = vpop.f32.mrb[0].mxu0
  %v316 = vadd.f32 0.0, %v315
  %v317 = vpop.f32.mrb[0].mxu0
  %v318 = vadd.f32 0.0, %v317
  %v319 = vpop.f32.mrb[0].mxu0
  %v320 = vadd.f32 0.0, %v319
  %321 = vdwg.mxu0
  %v322 = vadd.f32 %v238, %v314
  %v323 = vadd.f32 %v240, %v316
  %v324 = vadd.f32 %v242, %v318
  %v325 = vadd.f32 %v244, %v320
  %326 = vmatprep.subr.bf16.mxu0 %v121
  %327 = vmatpush1.bf16.msra.mxu0 %v120
  %328 = vmatprep.subr.bf16.mxu0 %v123
  %329 = vmatpush1.bf16.msra.mxu0 %v122
  %330 = vmatprep.subr.bf16.mxu0 0
  %331 = vmatpush1.bf16.msra.mxu0 0
  %332 = vmatprep.subr.bf16.mxu0 0
  %333 = vmatpush1.bf16.msra.mxu0 0
  %334 = vmatprep.subr.bf16.mxu0 0
  %335 = vmatpush1.bf16.msra.mxu0 0
  %336 = vmatprep.subr.bf16.mxu0 0
  %337 = vmatpush1.bf16.msra.mxu0 0
  %338 = vmatprep.subr.bf16.mxu0 0
  %339 = vmatpush1.bf16.msra.mxu0 0
  %340 = vmatprep.subr.bf16.mxu0 0
  %341 = vmatpush1.bf16.msra.mxu0 0
  %342 = vmatprep.subr.bf16.mxu0 0
  %343 = vmatpush1.bf16.msra.mxu0 0
  %344 = vmatprep.subr.bf16.mxu0 0
  %345 = vmatpush1.bf16.msra.mxu0 0
  %346 = vmatprep.subr.bf16.mxu0 0
  %347 = vmatpush1.bf16.msra.mxu0 0
  %348 = vmatprep.subr.bf16.mxu0 0
  %349 = vmatpush1.bf16.msra.mxu0 0
  %350 = vmatprep.subr.bf16.mxu0 0
  %351 = vmatpush1.bf16.msra.mxu0 0
  %352 = vmatprep.subr.bf16.mxu0 0
  %353 = vmatpush1.bf16.msra.mxu0 0
  %354 = vmatprep.subr.bf16.mxu0 0
  %355 = vmatpush1.bf16.msra.mxu0 0
  %356 = vmatprep.subr.bf16.mxu0 0
  %357 = vmatpush1.bf16.msra.mxu0 0
  %358 = vmatprep.mubr.bf16.mxu0 0
  %359 = vmatmul.mubr.bf16.gmra.mrb[0].mxu0 %v277
  %v360 = vpop.f32.mrb[0].mxu0
  %v361 = vadd.f32 0.0, %v360
  %v362 = vpop.f32.mrb[0].mxu0
  %v363 = vadd.f32 0.0, %v362
  %v364 = vpop.f32.mrb[0].mxu0
  %v365 = vadd.f32 0.0, %v364
  %v366 = vpop.f32.mrb[0].mxu0
  %v367 = vadd.f32 0.0, %v366
  %368 = vdwg.mxu0
  %369 = vmatprep.subr.bf16.mxu0 %v193
  %370 = vmatpush1.bf16.msra.mxu0 %v192
  %371 = vmatprep.subr.bf16.mxu0 %v195
  %372 = vmatpush1.bf16.msra.mxu0 %v194
  %373 = vmatprep.subr.bf16.mxu0 0
  %374 = vmatpush1.bf16.msra.mxu0 0
  %375 = vmatprep.subr.bf16.mxu0 0
  %376 = vmatpush1.bf16.msra.mxu0 0
  %377 = vmatprep.subr.bf16.mxu0 0
  %378 = vmatpush1.bf16.msra.mxu0 0
  %379 = vmatprep.subr.bf16.mxu0 0
  %380 = vmatpush1.bf16.msra.mxu0 0
  %381 = vmatprep.subr.bf16.mxu0 0
  %382 = vmatpush1.bf16.msra.mxu0 0
  %383 = vmatprep.subr.bf16.mxu0 0
  %384 = vmatpush1.bf16.msra.mxu0 0
  %385 = vmatprep.subr.bf16.mxu0 0
  %386 = vmatpush1.bf16.msra.mxu0 0
  %387 = vmatprep.subr.bf16.mxu0 0
  %388 = vmatpush1.bf16.msra.mxu0 0
  %389 = vmatprep.subr.bf16.mxu0 0
  %390 = vmatpush1.bf16.msra.mxu0 0
  %391 = vmatprep.subr.bf16.mxu0 0
  %392 = vmatpush1.bf16.msra.mxu0 0
  %393 = vmatprep.subr.bf16.mxu0 0
  %394 = vmatpush1.bf16.msra.mxu0 0
  %395 = vmatprep.subr.bf16.mxu0 0
  %396 = vmatpush1.bf16.msra.mxu0 0
  %397 = vmatprep.subr.bf16.mxu0 0
  %398 = vmatpush1.bf16.msra.mxu0 0
  %399 = vmatprep.subr.bf16.mxu0 0
  %400 = vmatpush1.bf16.msra.mxu0 0
  %401 = vmatprep.mubr.bf16.mxu0 0
  %402 = vmatmul.mubr.bf16.gmra.mrb[0].mxu0 %v130
  %v403 = vpop.f32.mrb[0].mxu0
  %v404 = vadd.f32 %v361, %v403
  %v405 = vpop.f32.mrb[0].mxu0
  %v406 = vadd.f32 %v363, %v405
  %v407 = vpop.f32.mrb[0].mxu0
  %v408 = vadd.f32 %v365, %v407
  %v409 = vpop.f32.mrb[0].mxu0
  %v410 = vadd.f32 %v367, %v409
  %411 = vdwg.mxu0
  %v414 = vunpack.c.l.b16 %v37
  %v415 = vunpack.c.l.b16 %v41
  %v416 = vpack.c.b16 %v415, %v414
  %v418 = vsel %vm128, %v416, 0
  %420 = vmatprep.subr.bf16.mxu0 %v269
  %421 = vmatpush1.bf16.msra.mxu0 %v268
  %422 = vmatprep.subr.bf16.mxu0 %v271
  %423 = vmatpush1.bf16.msra.mxu0 %v270
  %424 = vmatprep.subr.bf16.mxu0 0
  %425 = vmatpush1.bf16.msra.mxu0 0
  %426 = vmatprep.subr.bf16.mxu0 0
  %427 = vmatpush1.bf16.msra.mxu0 0
  %428 = vmatprep.subr.bf16.mxu0 0
  %429 = vmatpush1.bf16.msra.mxu0 0
  %430 = vmatprep.subr.bf16.mxu0 0
  %431 = vmatpush1.bf16.msra.mxu0 0
  %432 = vmatprep.subr.bf16.mxu0 0
  %433 = vmatpush1.bf16.msra.mxu0 0
  %434 = vmatprep.subr.bf16.mxu0 0
  %435 = vmatpush1.bf16.msra.mxu0 0
  %436 = vmatprep.subr.bf16.mxu0 0
  %437 = vmatpush1.bf16.msra.mxu0 0
  %438 = vmatprep.subr.bf16.mxu0 0
  %439 = vmatpush1.bf16.msra.mxu0 0
  %440 = vmatprep.subr.bf16.mxu0 0
  %441 = vmatpush1.bf16.msra.mxu0 0
  %442 = vmatprep.subr.bf16.mxu0 0
  %443 = vmatpush1.bf16.msra.mxu0 0
  %444 = vmatprep.subr.bf16.mxu0 0
  %445 = vmatpush1.bf16.msra.mxu0 0
  %446 = vmatprep.subr.bf16.mxu0 0
  %447 = vmatpush1.bf16.msra.mxu0 0
  %448 = vmatprep.subr.bf16.mxu0 0
  %449 = vmatpush1.bf16.msra.mxu0 0
  %450 = vmatprep.subr.bf16.mxu0 0
  %451 = vmatpush1.bf16.msra.mxu0 0
  %452 = vmatprep.mubr.bf16.mxu0 0
  %453 = vmatmul.mubr.bf16.gmra.mrb[0].mxu0 %v418
  %v454 = vpop.f32.mrb[0].mxu0
  %v455 = vadd.f32 0.0, %v454
  %v456 = vpop.f32.mrb[0].mxu0
  %v457 = vadd.f32 0.0, %v456
  %v458 = vpop.f32.mrb[0].mxu0
  %v459 = vadd.f32 0.0, %v458
  %v460 = vpop.f32.mrb[0].mxu0
  %v461 = vadd.f32 0.0, %v460
  %462 = vdwg.mxu0
  %v463 = vadd.f32 %v404, %v455
  %v464 = vadd.f32 %v406, %v457
  %v465 = vadd.f32 %v408, %v459
  %v466 = vadd.f32 %v410, %v461
  %v467 = vmax.f32 %v322, %v463
  %v468 = vmax.f32 %v323, %v464
  %v469 = vmax.f32 %v324, %v465
  %v470 = vmax.f32 %v325, %v466
  %v471 = vmax.f32 %v467, %v468
  %v472 = vmax.f32 %v469, %v470
  %v474 = vlaneseq
  %v475 = vshrl.u32 %v474, 7
  %v476 = vsub.s32 0, %v475
  %v477 = vrot.slane %v97, %v476
  %v479 = vadd.f32 %v471, %v477
  %v480 = vadd.f32 %v472, %v477
  %v481 = vmax.f32 %v479, 0.0
  %v482 = vmax.f32 %v480, 0.0
  %483 = vmatprep.subr.bf16.mxu0 %v121
  %484 = vmatpush1.bf16.msra.mxu0 %v120
  %485 = vmatprep.subr.bf16.mxu0 %v123
  %486 = vmatpush1.bf16.msra.mxu0 %v122
  %487 = vmatprep.subr.bf16.mxu0 0
  %488 = vmatpush1.bf16.msra.mxu0 0
  %489 = vmatprep.subr.bf16.mxu0 0
  %490 = vmatpush1.bf16.msra.mxu0 0
  %491 = vmatprep.subr.bf16.mxu0 0
  %492 = vmatpush1.bf16.msra.mxu0 0
  %493 = vmatprep.subr.bf16.mxu0 0
  %494 = vmatpush1.bf16.msra.mxu0 0
  %495 = vmatprep.subr.bf16.mxu0 0
  %496 = vmatpush1.bf16.msra.mxu0 0
  %497 = vmatprep.subr.bf16.mxu0 0
  %498 = vmatpush1.bf16.msra.mxu0 0
  %499 = vmatprep.subr.bf16.mxu0 0
  %500 = vmatpush1.bf16.msra.mxu0 0
  %501 = vmatprep.subr.bf16.mxu0 0
  %502 = vmatpush1.bf16.msra.mxu0 0
  %503 = vmatprep.subr.bf16.mxu0 0
  %504 = vmatpush1.bf16.msra.mxu0 0
  %505 = vmatprep.subr.bf16.mxu0 0
  %506 = vmatpush1.bf16.msra.mxu0 0
  %507 = vmatprep.subr.bf16.mxu0 0
  %508 = vmatpush1.bf16.msra.mxu0 0
  %509 = vmatprep.subr.bf16.mxu0 0
  %510 = vmatpush1.bf16.msra.mxu0 0
  %511 = vmatprep.subr.bf16.mxu0 0
  %512 = vmatpush1.bf16.msra.mxu0 0
  %513 = vmatprep.subr.bf16.mxu0 0
  %514 = vmatpush1.bf16.msra.mxu0 0
  %515 = vmatprep.mubr.bf16.mxu0 0
  %516 = vmatmul.mubr.bf16.gmra.mrb[0].mxu0 %v418
  %v517 = vpop.f32.mrb[0].mxu0
  %v518 = vadd.f32 0.0, %v517
  %v519 = vpop.f32.mrb[0].mxu0
  %v520 = vadd.f32 0.0, %v519
  %v521 = vpop.f32.mrb[0].mxu0
  %v522 = vadd.f32 0.0, %v521
  %v523 = vpop.f32.mrb[0].mxu0
  %v524 = vadd.f32 0.0, %v523
  %525 = vdwg.mxu0
  %526 = vmatprep.subr.bf16.mxu0 %v193
  %527 = vmatpush1.bf16.msra.mxu0 %v192
  %528 = vmatprep.subr.bf16.mxu0 %v195
  %529 = vmatpush1.bf16.msra.mxu0 %v194
  %530 = vmatprep.subr.bf16.mxu0 0
  %531 = vmatpush1.bf16.msra.mxu0 0
  %532 = vmatprep.subr.bf16.mxu0 0
  %533 = vmatpush1.bf16.msra.mxu0 0
  %534 = vmatprep.subr.bf16.mxu0 0
  %535 = vmatpush1.bf16.msra.mxu0 0
  %536 = vmatprep.subr.bf16.mxu0 0
  %537 = vmatpush1.bf16.msra.mxu0 0
  %538 = vmatprep.subr.bf16.mxu0 0
  %539 = vmatpush1.bf16.msra.mxu0 0
  %540 = vmatprep.subr.bf16.mxu0 0
  %541 = vmatpush1.bf16.msra.mxu0 0
  %542 = vmatprep.subr.bf16.mxu0 0
  %543 = vmatpush1.bf16.msra.mxu0 0
  %544 = vmatprep.subr.bf16.mxu0 0
  %545 = vmatpush1.bf16.msra.mxu0 0
  %546 = vmatprep.subr.bf16.mxu0 0
  %547 = vmatpush1.bf16.msra.mxu0 0
  %548 = vmatprep.subr.bf16.mxu0 0
  %549 = vmatpush1.bf16.msra.mxu0 0
  %550 = vmatprep.subr.bf16.mxu0 0
  %551 = vmatpush1.bf16.msra.mxu0 0
  %552 = vmatprep.subr.bf16.mxu0 0
  %553 = vmatpush1.bf16.msra.mxu0 0
  %554 = vmatprep.subr.bf16.mxu0 0
  %555 = vmatpush1.bf16.msra.mxu0 0
  %556 = vmatprep.subr.bf16.mxu0 0
  %557 = vmatpush1.bf16.msra.mxu0 0
  %558 = vmatprep.mubr.bf16.mxu0 0
  %559 = vmatmul.mubr.bf16.gmra.mrb[0].mxu0 %v277
  %v560 = vpop.f32.mrb[0].mxu0
  %v561 = vadd.f32 %v518, %v560
  %v562 = vpop.f32.mrb[0].mxu0
  %v563 = vadd.f32 %v520, %v562
  %v564 = vpop.f32.mrb[0].mxu0
  %v565 = vadd.f32 %v522, %v564
  %v566 = vpop.f32.mrb[0].mxu0
  %v567 = vadd.f32 %v524, %v566
  %568 = vdwg.mxu0
  %v569 = vpack.c.b16 %v46, %v45
  %v571 = vsel %vm128, %v569, 0
  %573 = vmatprep.subr.bf16.mxu0 %v269
  %574 = vmatpush1.bf16.msra.mxu0 %v268
  %575 = vmatprep.subr.bf16.mxu0 %v271
  %576 = vmatpush1.bf16.msra.mxu0 %v270
  %577 = vmatprep.subr.bf16.mxu0 0
  %578 = vmatpush1.bf16.msra.mxu0 0
  %579 = vmatprep.subr.bf16.mxu0 0
  %580 = vmatpush1.bf16.msra.mxu0 0
  %581 = vmatprep.subr.bf16.mxu0 0
  %582 = vmatpush1.bf16.msra.mxu0 0
  %583 = vmatprep.subr.bf16.mxu0 0
  %584 = vmatpush1.bf16.msra.mxu0 0
  %585 = vmatprep.subr.bf16.mxu0 0
  %586 = vmatpush1.bf16.msra.mxu0 0
  %587 = vmatprep.subr.bf16.mxu0 0
  %588 = vmatpush1.bf16.msra.mxu0 0
  %589 = vmatprep.subr.bf16.mxu0 0
  %590 = vmatpush1.bf16.msra.mxu0 0
  %591 = vmatprep.subr.bf16.mxu0 0
  %592 = vmatpush1.bf16.msra.mxu0 0
  %593 = vmatprep.subr.bf16.mxu0 0
  %594 = vmatpush1.bf16.msra.mxu0 0
  %595 = vmatprep.subr.bf16.mxu0 0
  %596 = vmatpush1.bf16.msra.mxu0 0
  %597 = vmatprep.subr.bf16.mxu0 0
  %598 = vmatpush1.bf16.msra.mxu0 0
  %599 = vmatprep.subr.bf16.mxu0 0
  %600 = vmatpush1.bf16.msra.mxu0 0
  %601 = vmatprep.subr.bf16.mxu0 0
  %602 = vmatpush1.bf16.msra.mxu0 0
  %603 = vmatprep.subr.bf16.mxu0 0
  %604 = vmatpush1.bf16.msra.mxu0 0
  %605 = vmatprep.mubr.bf16.mxu0 0
  %606 = vmatmul.mubr.bf16.gmra.mrb[0].mxu0 %v571
  %v607 = vpop.f32.mrb[0].mxu0
  %v608 = vadd.f32 0.0, %v607
  %v609 = vpop.f32.mrb[0].mxu0
  %v610 = vadd.f32 0.0, %v609
  %v611 = vpop.f32.mrb[0].mxu0
  %v612 = vadd.f32 0.0, %v611
  %v613 = vpop.f32.mrb[0].mxu0
  %v614 = vadd.f32 0.0, %v613
  %615 = vdwg.mxu0
  %v616 = vadd.f32 %v561, %v608
  %v617 = vadd.f32 %v563, %v610
  %v618 = vadd.f32 %v565, %v612
  %v619 = vadd.f32 %v567, %v614
  %620 = vmatprep.subr.bf16.mxu0 %v121
  %621 = vmatpush1.bf16.msra.mxu0 %v120
  %622 = vmatprep.subr.bf16.mxu0 %v123
  %623 = vmatpush1.bf16.msra.mxu0 %v122
  %624 = vmatprep.subr.bf16.mxu0 0
  %625 = vmatpush1.bf16.msra.mxu0 0
  %626 = vmatprep.subr.bf16.mxu0 0
  %627 = vmatpush1.bf16.msra.mxu0 0
  %628 = vmatprep.subr.bf16.mxu0 0
  %629 = vmatpush1.bf16.msra.mxu0 0
  %630 = vmatprep.subr.bf16.mxu0 0
  %631 = vmatpush1.bf16.msra.mxu0 0
  %632 = vmatprep.subr.bf16.mxu0 0
  %633 = vmatpush1.bf16.msra.mxu0 0
  %634 = vmatprep.subr.bf16.mxu0 0
  %635 = vmatpush1.bf16.msra.mxu0 0
  %636 = vmatprep.subr.bf16.mxu0 0
  %637 = vmatpush1.bf16.msra.mxu0 0
  %638 = vmatprep.subr.bf16.mxu0 0
  %639 = vmatpush1.bf16.msra.mxu0 0
  %640 = vmatprep.subr.bf16.mxu0 0
  %641 = vmatpush1.bf16.msra.mxu0 0
  %642 = vmatprep.subr.bf16.mxu0 0
  %643 = vmatpush1.bf16.msra.mxu0 0
  %644 = vmatprep.subr.bf16.mxu0 0
  %645 = vmatpush1.bf16.msra.mxu0 0
  %646 = vmatprep.subr.bf16.mxu0 0
  %647 = vmatpush1.bf16.msra.mxu0 0
  %648 = vmatprep.subr.bf16.mxu0 0
  %649 = vmatpush1.bf16.msra.mxu0 0
  %650 = vmatprep.subr.bf16.mxu0 0
  %651 = vmatpush1.bf16.msra.mxu0 0
  %652 = vmatprep.mubr.bf16.mxu0 0
  %653 = vmatmul.mubr.bf16.gmra.mrb[0].mxu0 %v571
  %v654 = vpop.f32.mrb[0].mxu0
  %v655 = vadd.f32 0.0, %v654
  %v656 = vpop.f32.mrb[0].mxu0
  %v657 = vadd.f32 0.0, %v656
  %v658 = vpop.f32.mrb[0].mxu0
  %v659 = vadd.f32 0.0, %v658
  %v660 = vpop.f32.mrb[0].mxu0
  %v661 = vadd.f32 0.0, %v660
  %662 = vdwg.mxu0
  %663 = vmatprep.subr.bf16.mxu0 %v193
  %664 = vmatpush1.bf16.msra.mxu0 %v192
  %665 = vmatprep.subr.bf16.mxu0 %v195
  %666 = vmatpush1.bf16.msra.mxu0 %v194
  %667 = vmatprep.subr.bf16.mxu0 0
  %668 = vmatpush1.bf16.msra.mxu0 0
  %669 = vmatprep.subr.bf16.mxu0 0
  %670 = vmatpush1.bf16.msra.mxu0 0
  %671 = vmatprep.subr.bf16.mxu0 0
  %672 = vmatpush1.bf16.msra.mxu0 0
  %673 = vmatprep.subr.bf16.mxu0 0
  %674 = vmatpush1.bf16.msra.mxu0 0
  %675 = vmatprep.subr.bf16.mxu0 0
  %676 = vmatpush1.bf16.msra.mxu0 0
  %677 = vmatprep.subr.bf16.mxu0 0
  %678 = vmatpush1.bf16.msra.mxu0 0
  %679 = vmatprep.subr.bf16.mxu0 0
  %680 = vmatpush1.bf16.msra.mxu0 0
  %681 = vmatprep.subr.bf16.mxu0 0
  %682 = vmatpush1.bf16.msra.mxu0 0
  %683 = vmatprep.subr.bf16.mxu0 0
  %684 = vmatpush1.bf16.msra.mxu0 0
  %685 = vmatprep.subr.bf16.mxu0 0
  %686 = vmatpush1.bf16.msra.mxu0 0
  %687 = vmatprep.subr.bf16.mxu0 0
  %688 = vmatpush1.bf16.msra.mxu0 0
  %689 = vmatprep.subr.bf16.mxu0 0
  %690 = vmatpush1.bf16.msra.mxu0 0
  %691 = vmatprep.subr.bf16.mxu0 0
  %692 = vmatpush1.bf16.msra.mxu0 0
  %693 = vmatprep.subr.bf16.mxu0 0
  %694 = vmatpush1.bf16.msra.mxu0 0
  %695 = vmatprep.mubr.bf16.mxu0 0
  %696 = vmatmul.mubr.bf16.gmra.mrb[0].mxu0 %v418
  %v697 = vpop.f32.mrb[0].mxu0
  %v698 = vadd.f32 %v655, %v697
  %v699 = vpop.f32.mrb[0].mxu0
  %v700 = vadd.f32 %v657, %v699
  %v701 = vpop.f32.mrb[0].mxu0
  %v702 = vadd.f32 %v659, %v701
  %v703 = vpop.f32.mrb[0].mxu0
  %v704 = vadd.f32 %v661, %v703
  %705 = vdwg.mxu0
  %v708 = vunpack.c.l.b16 %v95
  %v709 = vunpack.c.l.b16 %v96
  %v710 = vpack.c.b16 %v709, %v708
  %v712 = vsel %vm128, %v710, 0
  %714 = vmatprep.subr.bf16.mxu0 %v269
  %715 = vmatpush1.bf16.msra.mxu0 %v268
  %716 = vmatprep.subr.bf16.mxu0 %v271
  %717 = vmatpush1.bf16.msra.mxu0 %v270
  %718 = vmatprep.subr.bf16.mxu0 0
  %719 = vmatpush1.bf16.msra.mxu0 0
  %720 = vmatprep.subr.bf16.mxu0 0
  %721 = vmatpush1.bf16.msra.mxu0 0
  %722 = vmatprep.subr.bf16.mxu0 0
  %723 = vmatpush1.bf16.msra.mxu0 0
  %724 = vmatprep.subr.bf16.mxu0 0
  %725 = vmatpush1.bf16.msra.mxu0 0
  %726 = vmatprep.subr.bf16.mxu0 0
  %727 = vmatpush1.bf16.msra.mxu0 0
  %728 = vmatprep.subr.bf16.mxu0 0
  %729 = vmatpush1.bf16.msra.mxu0 0
  %730 = vmatprep.subr.bf16.mxu0 0
  %731 = vmatpush1.bf16.msra.mxu0 0
  %732 = vmatprep.subr.bf16.mxu0 0
  %733 = vmatpush1.bf16.msra.mxu0 0
  %734 = vmatprep.subr.bf16.mxu0 0
  %735 = vmatpush1.bf16.msra.mxu0 0
  %736 = vmatprep.subr.bf16.mxu0 0
  %737 = vmatpush1.bf16.msra.mxu0 0
  %738 = vmatprep.subr.bf16.mxu0 0
  %739 = vmatpush1.bf16.msra.mxu0 0
  %740 = vmatprep.subr.bf16.mxu0 0
  %741 = vmatpush1.bf16.msra.mxu0 0
  %742 = vmatprep.subr.bf16.mxu0 0
  %743 = vmatpush1.bf16.msra.mxu0 0
  %744 = vmatprep.subr.bf16.mxu0 0
  %745 = vmatpush1.bf16.msra.mxu0 0
  %746 = vmatprep.mubr.bf16.mxu0 0
  %747 = vmatmul.mubr.bf16.gmra.mrb[0].mxu0 %v712
  %v748 = vpop.f32.mrb[0].mxu0
  %v749 = vadd.f32 0.0, %v748
  %v750 = vpop.f32.mrb[0].mxu0
  %v751 = vadd.f32 0.0, %v750
  %v752 = vpop.f32.mrb[0].mxu0
  %v753 = vadd.f32 0.0, %v752
  %v754 = vpop.f32.mrb[0].mxu0
  %v755 = vadd.f32 0.0, %v754
  %756 = vdwg.mxu0
  %v757 = vadd.f32 %v698, %v749
  %v758 = vadd.f32 %v700, %v751
  %v759 = vadd.f32 %v702, %v753
  %v760 = vadd.f32 %v704, %v755
  %v761 = vmax.f32 %v616, %v757
  %v762 = vmax.f32 %v617, %v758
  %v763 = vmax.f32 %v618, %v759
  %v764 = vmax.f32 %v619, %v760
  %v765 = vmax.f32 %v761, %v762
  %v766 = vmax.f32 %v763, %v764
  %v767 = vadd.f32 %v765, %v477
  %v768 = vadd.f32 %v766, %v477
  %v769 = vmax.f32 %v767, 0.0
  %v770 = vmax.f32 %v768, 0.0
  %v771 = vpack.c.bf16 %v481, %v481
  %v772 = vpack.c.bf16 %v482, %v482
  %v773 = vpack.c.bf16 %v769, %v769
  %v774 = vpack.c.bf16 %v770, %v770
  %v776 = vshrl.u32 %v773, 16
  %v778 = vrot.slane %v776, 7
  %v779 = vshll.u32 %v773, 16
  %v781 = vor.u32 %v778, %v779
  %v783 = vshrl.u32 %v774, 16
  %v785 = vrot.slane %v783, 7
  %v786 = vshll.u32 %v774, 16
  %v788 = vor.u32 %v785, %v786
  %v791 = vsel %vm67, 0, %v781
  %v792 = vsel %vm67, 0, %v788
  %v794 = vshrl.u32 %v771, 16
  %v796 = vshll.u32 %v771, 16
  %v798 = vrot.slane %v796, 1
  %v799 = vor.u32 %v794, %v798
  %v801 = vshrl.u32 %v772, 16
  %v803 = vshll.u32 %v772, 16
  %v805 = vrot.slane %v803, 1
  %v806 = vor.u32 %v801, %v805
  %v809 = vsel %vm94, %v799, 0
  %v810 = vsel %vm94, %v806, 0
  %v811 = vld [vmem:[%s4] sm:$0x1]
  %v812 = vld [vmem:[%s3] sm:$0xff]
  %v813 = vld [vmem:[%s3 + $0x8] sm:$0xff]
  %v814 = vld [vmem:[%s3 + $0x10] sm:$0xff]
  %v815 = vld [vmem:[%s3 + $0x18] sm:$0xff]
  %v816 = vld [vmem:[%s3 + $0x20] sm:$0xff]
  %v817 = vld [vmem:[%s3 + $0x28] sm:$0xff]
  %v818 = vld [vmem:[%s3 + $0x30] sm:$0xff]
  %v819 = vld [vmem:[%s3 + $0x38] sm:$0xff]
  %v820 = vld [vmem:[%s3 + $0x40] sm:$0xff]
  %v821 = vld [vmem:[%s3 + $0x48] sm:$0xff]
  %v822 = vld [vmem:[%s3 + $0x50] sm:$0xff]
  %v823 = vld [vmem:[%s3 + $0x58] sm:$0xff]
  %v824 = vld [vmem:[%s3 + $0x60] sm:$0xff]
  %v825 = vld [vmem:[%s3 + $0x68] sm:$0xff]
  %v826 = vld [vmem:[%s3 + $0x70] sm:$0xff]
  %v827 = vld [vmem:[%s3 + $0x78] sm:$0xff]
  %s828 = scalar_lea.vmem %s3, 128
  %v829 = vld [vmem:[%s828] sm:$0xff]
  %v830 = vld [vmem:[%s828 + $0x8] sm:$0xff]
  %v831 = vld [vmem:[%s828 + $0x10] sm:$0xff]
  %v832 = vld [vmem:[%s828 + $0x18] sm:$0xff]
  %v833 = vld [vmem:[%s828 + $0x20] sm:$0xff]
  %v834 = vld [vmem:[%s828 + $0x28] sm:$0xff]
  %v835 = vld [vmem:[%s828 + $0x30] sm:$0xff]
  %v836 = vld [vmem:[%s828 + $0x38] sm:$0xff]
  %v837 = vld [vmem:[%s828 + $0x40] sm:$0xff]
  %v838 = vld [vmem:[%s828 + $0x48] sm:$0xff]
  %v839 = vld [vmem:[%s828 + $0x50] sm:$0xff]
  %v840 = vld [vmem:[%s828 + $0x58] sm:$0xff]
  %v841 = vld [vmem:[%s828 + $0x60] sm:$0xff]
  %v842 = vld [vmem:[%s828 + $0x68] sm:$0xff]
  %v843 = vld [vmem:[%s828 + $0x70] sm:$0xff]
  %v844 = vld [vmem:[%s828 + $0x78] sm:$0xff]
  %v847 = vunpack.c.l.b16 %v771
  %v848 = vunpack.c.l.b16 %v772
  %v849 = vpack.c.b16 %v848, %v847
  %v867 = vunpack.c.l.b16 %v829
  %v868 = vunpack.c.h.b16 %v829
  %v869 = vunpack.c.l.b16 %v830
  %v870 = vunpack.c.h.b16 %v830
  %v871 = vunpack.c.l.b16 %v831
  %v872 = vunpack.c.h.b16 %v831
  %v873 = vunpack.c.l.b16 %v832
  %v874 = vunpack.c.h.b16 %v832
  %v875 = vunpack.c.l.b16 %v833
  %v876 = vunpack.c.h.b16 %v833
  %v877 = vunpack.c.l.b16 %v834
  %v878 = vunpack.c.h.b16 %v834
  %v879 = vunpack.c.l.b16 %v835
  %v880 = vunpack.c.h.b16 %v835
  %v881 = vunpack.c.l.b16 %v836
  %v882 = vunpack.c.h.b16 %v836
  %v883 = vunpack.c.l.b16 %v837
  %v884 = vunpack.c.h.b16 %v837
  %v885 = vunpack.c.l.b16 %v838
  %v886 = vunpack.c.h.b16 %v838
  %v887 = vunpack.c.l.b16 %v839
  %v888 = vunpack.c.h.b16 %v839
  %v889 = vunpack.c.l.b16 %v840
  %v890 = vunpack.c.h.b16 %v840
  %v891 = vunpack.c.l.b16 %v841
  %v892 = vunpack.c.h.b16 %v841
  %v893 = vunpack.c.l.b16 %v842
  %v894 = vunpack.c.h.b16 %v842
  %v895 = vunpack.c.l.b16 %v843
  %v896 = vunpack.c.h.b16 %v843
  %v897 = vunpack.c.l.b16 %v844
  %v898 = vunpack.c.h.b16 %v844
  %v899 = vpack.c.b16 %v869, %v867
  %v900 = vpack.c.b16 %v870, %v868
  %v901 = vpack.c.b16 %v873, %v871
  %v902 = vpack.c.b16 %v874, %v872
  %v903 = vpack.c.b16 %v877, %v875
  %v904 = vpack.c.b16 %v878, %v876
  %v905 = vpack.c.b16 %v881, %v879
  %v906 = vpack.c.b16 %v882, %v880
  %v907 = vpack.c.b16 %v885, %v883
  %v908 = vpack.c.b16 %v886, %v884
  %v909 = vpack.c.b16 %v889, %v887
  %v910 = vpack.c.b16 %v890, %v888
  %v911 = vpack.c.b16 %v893, %v891
  %v912 = vpack.c.b16 %v894, %v892
  %v913 = vpack.c.b16 %v897, %v895
  %v914 = vpack.c.b16 %v898, %v896
  %931 = vmatprep.subr.bf16.mxu0 %v900
  %932 = vmatpush1.bf16.msra.mxu0 %v899
  %933 = vmatprep.subr.bf16.mxu0 %v902
  %934 = vmatpush1.bf16.msra.mxu0 %v901
  %935 = vmatprep.subr.bf16.mxu0 %v904
  %936 = vmatpush1.bf16.msra.mxu0 %v903
  %937 = vmatprep.subr.bf16.mxu0 %v906
  %938 = vmatpush1.bf16.msra.mxu0 %v905
  %939 = vmatprep.subr.bf16.mxu0 %v908
  %940 = vmatpush1.bf16.msra.mxu0 %v907
  %941 = vmatprep.subr.bf16.mxu0 %v910
  %942 = vmatpush1.bf16.msra.mxu0 %v909
  %943 = vmatprep.subr.bf16.mxu0 %v912
  %944 = vmatpush1.bf16.msra.mxu0 %v911
  %945 = vmatprep.subr.bf16.mxu0 %v914
  %946 = vmatpush1.bf16.msra.mxu0 %v913
  %947 = vmatprep.subr.bf16.mxu0 0
  %948 = vmatpush1.bf16.msra.mxu0 0
  %949 = vmatprep.subr.bf16.mxu0 0
  %950 = vmatpush1.bf16.msra.mxu0 0
  %951 = vmatprep.subr.bf16.mxu0 0
  %952 = vmatpush1.bf16.msra.mxu0 0
  %953 = vmatprep.subr.bf16.mxu0 0
  %954 = vmatpush1.bf16.msra.mxu0 0
  %955 = vmatprep.subr.bf16.mxu0 0
  %956 = vmatpush1.bf16.msra.mxu0 0
  %957 = vmatprep.subr.bf16.mxu0 0
  %958 = vmatpush1.bf16.msra.mxu0 0
  %959 = vmatprep.subr.bf16.mxu0 0
  %960 = vmatpush1.bf16.msra.mxu0 0
  %961 = vmatprep.subr.bf16.mxu0 0
  %962 = vmatpush1.bf16.msra.mxu0 0
  %963 = vmatprep.mubr.bf16.mxu0 0
  %964 = vmatmul.mubr.bf16.gmra.mrb[0].mxu0 %v849
  %v965 = vpop.f32.mrb[0].mxu0
  %v966 = vadd.f32 0.0, %v965
  %v967 = vpop.f32.mrb[0].mxu0
  %v968 = vadd.f32 0.0, %v967
  %v969 = vpop.f32.mrb[0].mxu0
  %v970 = vadd.f32 0.0, %v969
  %v971 = vpop.f32.mrb[0].mxu0
  %v972 = vadd.f32 0.0, %v971
  %973 = vdwg.mxu0
  %v976 = vunpack.c.l.b16 %v791
  %v977 = vunpack.c.l.b16 %v792
  %v978 = vpack.c.b16 %v977, %v976
  %v996 = vunpack.c.l.b16 %v812
  %v997 = vunpack.c.h.b16 %v812
  %v998 = vunpack.c.l.b16 %v813
  %v999 = vunpack.c.h.b16 %v813
  %v1000 = vunpack.c.l.b16 %v814
  %v1001 = vunpack.c.h.b16 %v814
  %v1002 = vunpack.c.l.b16 %v815
  %v1003 = vunpack.c.h.b16 %v815
  %v1004 = vunpack.c.l.b16 %v816
  %v1005 = vunpack.c.h.b16 %v816
  %v1006 = vunpack.c.l.b16 %v817
  %v1007 = vunpack.c.h.b16 %v817
  %v1008 = vunpack.c.l.b16 %v818
  %v1009 = vunpack.c.h.b16 %v818
  %v1010 = vunpack.c.l.b16 %v819
  %v1011 = vunpack.c.h.b16 %v819
  %v1012 = vunpack.c.l.b16 %v820
  %v1013 = vunpack.c.h.b16 %v820
  %v1014 = vunpack.c.l.b16 %v821
  %v1015 = vunpack.c.h.b16 %v821
  %v1016 = vunpack.c.l.b16 %v822
  %v1017 = vunpack.c.h.b16 %v822
  %v1018 = vunpack.c.l.b16 %v823
  %v1019 = vunpack.c.h.b16 %v823
  %v1020 = vunpack.c.l.b16 %v824
  %v1021 = vunpack.c.h.b16 %v824
  %v1022 = vunpack.c.l.b16 %v825
  %v1023 = vunpack.c.h.b16 %v825
  %v1024 = vunpack.c.l.b16 %v826
  %v1025 = vunpack.c.h.b16 %v826
  %v1026 = vunpack.c.l.b16 %v827
  %v1027 = vunpack.c.h.b16 %v827
  %v1028 = vpack.c.b16 %v998, %v996
  %v1029 = vpack.c.b16 %v999, %v997
  %v1030 = vpack.c.b16 %v1002, %v1000
  %v1031 = vpack.c.b16 %v1003, %v1001
  %v1032 = vpack.c.b16 %v1006, %v1004
  %v1033 = vpack.c.b16 %v1007, %v1005
  %v1034 = vpack.c.b16 %v1010, %v1008
  %v1035 = vpack.c.b16 %v1011, %v1009
  %v1036 = vpack.c.b16 %v1014, %v1012
  %v1037 = vpack.c.b16 %v1015, %v1013
  %v1038 = vpack.c.b16 %v1018, %v1016
  %v1039 = vpack.c.b16 %v1019, %v1017
  %v1040 = vpack.c.b16 %v1022, %v1020
  %v1041 = vpack.c.b16 %v1023, %v1021
  %v1042 = vpack.c.b16 %v1026, %v1024
  %v1043 = vpack.c.b16 %v1027, %v1025
  %1060 = vmatprep.subr.bf16.mxu0 %v1029
  %1061 = vmatpush1.bf16.msra.mxu0 %v1028
  %1062 = vmatprep.subr.bf16.mxu0 %v1031
  %1063 = vmatpush1.bf16.msra.mxu0 %v1030
  %1064 = vmatprep.subr.bf16.mxu0 %v1033
  %1065 = vmatpush1.bf16.msra.mxu0 %v1032
  %1066 = vmatprep.subr.bf16.mxu0 %v1035
  %1067 = vmatpush1.bf16.msra.mxu0 %v1034
  %1068 = vmatprep.subr.bf16.mxu0 %v1037
  %1069 = vmatpush1.bf16.msra.mxu0 %v1036
  %1070 = vmatprep.subr.bf16.mxu0 %v1039
  %1071 = vmatpush1.bf16.msra.mxu0 %v1038
  %1072 = vmatprep.subr.bf16.mxu0 %v1041
  %1073 = vmatpush1.bf16.msra.mxu0 %v1040
  %1074 = vmatprep.subr.bf16.mxu0 %v1043
  %1075 = vmatpush1.bf16.msra.mxu0 %v1042
  %1076 = vmatprep.subr.bf16.mxu0 0
  %1077 = vmatpush1.bf16.msra.mxu0 0
  %1078 = vmatprep.subr.bf16.mxu0 0
  %1079 = vmatpush1.bf16.msra.mxu0 0
  %1080 = vmatprep.subr.bf16.mxu0 0
  %1081 = vmatpush1.bf16.msra.mxu0 0
  %1082 = vmatprep.subr.bf16.mxu0 0
  %1083 = vmatpush1.bf16.msra.mxu0 0
  %1084 = vmatprep.subr.bf16.mxu0 0
  %1085 = vmatpush1.bf16.msra.mxu0 0
  %1086 = vmatprep.subr.bf16.mxu0 0
  %1087 = vmatpush1.bf16.msra.mxu0 0
  %1088 = vmatprep.subr.bf16.mxu0 0
  %1089 = vmatpush1.bf16.msra.mxu0 0
  %1090 = vmatprep.subr.bf16.mxu0 0
  %1091 = vmatpush1.bf16.msra.mxu0 0
  %1092 = vmatprep.mubr.bf16.mxu0 0
  %1093 = vmatmul.mubr.bf16.gmra.mrb[0].mxu0 %v978
  %v1094 = vpop.f32.mrb[0].mxu0
  %v1095 = vadd.f32 %v966, %v1094
  %v1096 = vpop.f32.mrb[0].mxu0
  %v1097 = vadd.f32 %v968, %v1096
  %v1098 = vpop.f32.mrb[0].mxu0
  %v1099 = vadd.f32 %v970, %v1098
  %v1100 = vpop.f32.mrb[0].mxu0
  %v1101 = vadd.f32 %v972, %v1100
  %1102 = vdwg.mxu0
  %s1103 = scalar_lea.vmem %s3, 256
  %v1104 = vld [vmem:[%s1103] sm:$0xff]
  %v1105 = vld [vmem:[%s1103 + $0x8] sm:$0xff]
  %v1106 = vld [vmem:[%s1103 + $0x10] sm:$0xff]
  %v1107 = vld [vmem:[%s1103 + $0x18] sm:$0xff]
  %v1108 = vld [vmem:[%s1103 + $0x20] sm:$0xff]
  %v1109 = vld [vmem:[%s1103 + $0x28] sm:$0xff]
  %v1110 = vld [vmem:[%s1103 + $0x30] sm:$0xff]
  %v1111 = vld [vmem:[%s1103 + $0x38] sm:$0xff]
  %v1112 = vld [vmem:[%s1103 + $0x40] sm:$0xff]
  %v1113 = vld [vmem:[%s1103 + $0x48] sm:$0xff]
  %v1114 = vld [vmem:[%s1103 + $0x50] sm:$0xff]
  %v1115 = vld [vmem:[%s1103 + $0x58] sm:$0xff]
  %v1116 = vld [vmem:[%s1103 + $0x60] sm:$0xff]
  %v1117 = vld [vmem:[%s1103 + $0x68] sm:$0xff]
  %v1118 = vld [vmem:[%s1103 + $0x70] sm:$0xff]
  %v1119 = vld [vmem:[%s1103 + $0x78] sm:$0xff]
  %v1122 = vunpack.c.l.b16 %v773
  %v1123 = vunpack.c.l.b16 %v774
  %v1124 = vpack.c.b16 %v1123, %v1122
  %v1142 = vunpack.c.l.b16 %v1104
  %v1143 = vunpack.c.h.b16 %v1104
  %v1144 = vunpack.c.l.b16 %v1105
  %v1145 = vunpack.c.h.b16 %v1105
  %v1146 = vunpack.c.l.b16 %v1106
  %v1147 = vunpack.c.h.b16 %v1106
  %v1148 = vunpack.c.l.b16 %v1107
  %v1149 = vunpack.c.h.b16 %v1107
  %v1150 = vunpack.c.l.b16 %v1108
  %v1151 = vunpack.c.h.b16 %v1108
  %v1152 = vunpack.c.l.b16 %v1109
  %v1153 = vunpack.c.h.b16 %v1109
  %v1154 = vunpack.c.l.b16 %v1110
  %v1155 = vunpack.c.h.b16 %v1110
  %v1156 = vunpack.c.l.b16 %v1111
  %v1157 = vunpack.c.h.b16 %v1111
  %v1158 = vunpack.c.l.b16 %v1112
  %v1159 = vunpack.c.h.b16 %v1112
  %v1160 = vunpack.c.l.b16 %v1113
  %v1161 = vunpack.c.h.b16 %v1113
  %v1162 = vunpack.c.l.b16 %v1114
  %v1163 = vunpack.c.h.b16 %v1114
  %v1164 = vunpack.c.l.b16 %v1115
  %v1165 = vunpack.c.h.b16 %v1115
  %v1166 = vunpack.c.l.b16 %v1116
  %v1167 = vunpack.c.h.b16 %v1116
  %v1168 = vunpack.c.l.b16 %v1117
  %v1169 = vunpack.c.h.b16 %v1117
  %v1170 = vunpack.c.l.b16 %v1118
  %v1171 = vunpack.c.h.b16 %v1118
  %v1172 = vunpack.c.l.b16 %v1119
  %v1173 = vunpack.c.h.b16 %v1119
  %v1174 = vpack.c.b16 %v1144, %v1142
  %v1175 = vpack.c.b16 %v1145, %v1143
  %v1176 = vpack.c.b16 %v1148, %v1146
  %v1177 = vpack.c.b16 %v1149, %v1147
  %v1178 = vpack.c.b16 %v1152, %v1150
  %v1179 = vpack.c.b16 %v1153, %v1151
  %v1180 = vpack.c.b16 %v1156, %v1154
  %v1181 = vpack.c.b16 %v1157, %v1155
  %v1182 = vpack.c.b16 %v1160, %v1158
  %v1183 = vpack.c.b16 %v1161, %v1159
  %v1184 = vpack.c.b16 %v1164, %v1162
  %v1185 = vpack.c.b16 %v1165, %v1163
  %v1186 = vpack.c.b16 %v1168, %v1166
  %v1187 = vpack.c.b16 %v1169, %v1167
  %v1188 = vpack.c.b16 %v1172, %v1170
  %v1189 = vpack.c.b16 %v1173, %v1171
  %1206 = vmatprep.subr.bf16.mxu0 %v1175
  %1207 = vmatpush1.bf16.msra.mxu0 %v1174
  %1208 = vmatprep.subr.bf16.mxu0 %v1177
  %1209 = vmatpush1.bf16.msra.mxu0 %v1176
  %1210 = vmatprep.subr.bf16.mxu0 %v1179
  %1211 = vmatpush1.bf16.msra.mxu0 %v1178
  %1212 = vmatprep.subr.bf16.mxu0 %v1181
  %1213 = vmatpush1.bf16.msra.mxu0 %v1180
  %1214 = vmatprep.subr.bf16.mxu0 %v1183
  %1215 = vmatpush1.bf16.msra.mxu0 %v1182
  %1216 = vmatprep.subr.bf16.mxu0 %v1185
  %1217 = vmatpush1.bf16.msra.mxu0 %v1184
  %1218 = vmatprep.subr.bf16.mxu0 %v1187
  %1219 = vmatpush1.bf16.msra.mxu0 %v1186
  %1220 = vmatprep.subr.bf16.mxu0 %v1189
  %1221 = vmatpush1.bf16.msra.mxu0 %v1188
  %1222 = vmatprep.subr.bf16.mxu0 0
  %1223 = vmatpush1.bf16.msra.mxu0 0
  %1224 = vmatprep.subr.bf16.mxu0 0
  %1225 = vmatpush1.bf16.msra.mxu0 0
  %1226 = vmatprep.subr.bf16.mxu0 0
  %1227 = vmatpush1.bf16.msra.mxu0 0
  %1228 = vmatprep.subr.bf16.mxu0 0
  %1229 = vmatpush1.bf16.msra.mxu0 0
  %1230 = vmatprep.subr.bf16.mxu0 0
  %1231 = vmatpush1.bf16.msra.mxu0 0
  %1232 = vmatprep.subr.bf16.mxu0 0
  %1233 = vmatpush1.bf16.msra.mxu0 0
  %1234 = vmatprep.subr.bf16.mxu0 0
  %1235 = vmatpush1.bf16.msra.mxu0 0
  %1236 = vmatprep.subr.bf16.mxu0 0
  %1237 = vmatpush1.bf16.msra.mxu0 0
  %1238 = vmatprep.mubr.bf16.mxu0 0
  %1239 = vmatmul.mubr.bf16.gmra.mrb[0].mxu0 %v1124
  %v1240 = vpop.f32.mrb[0].mxu0
  %v1241 = vadd.f32 0.0, %v1240
  %v1242 = vpop.f32.mrb[0].mxu0
  %v1243 = vadd.f32 0.0, %v1242
  %v1244 = vpop.f32.mrb[0].mxu0
  %v1245 = vadd.f32 0.0, %v1244
  %v1246 = vpop.f32.mrb[0].mxu0
  %v1247 = vadd.f32 0.0, %v1246
  %1248 = vdwg.mxu0
  %v1249 = vadd.f32 %v1095, %v1241
  %v1250 = vadd.f32 %v1097, %v1243
  %v1251 = vadd.f32 %v1099, %v1245
  %v1252 = vadd.f32 %v1101, %v1247
  %1253 = vmatprep.subr.bf16.mxu0 %v900
  %1254 = vmatpush1.bf16.msra.mxu0 %v899
  %1255 = vmatprep.subr.bf16.mxu0 %v902
  %1256 = vmatpush1.bf16.msra.mxu0 %v901
  %1257 = vmatprep.subr.bf16.mxu0 %v904
  %1258 = vmatpush1.bf16.msra.mxu0 %v903
  %1259 = vmatprep.subr.bf16.mxu0 %v906
  %1260 = vmatpush1.bf16.msra.mxu0 %v905
  %1261 = vmatprep.subr.bf16.mxu0 %v908
  %1262 = vmatpush1.bf16.msra.mxu0 %v907
  %1263 = vmatprep.subr.bf16.mxu0 %v910
  %1264 = vmatpush1.bf16.msra.mxu0 %v909
  %1265 = vmatprep.subr.bf16.mxu0 %v912
  %1266 = vmatpush1.bf16.msra.mxu0 %v911
  %1267 = vmatprep.subr.bf16.mxu0 %v914
  %1268 = vmatpush1.bf16.msra.mxu0 %v913
  %1269 = vmatprep.subr.bf16.mxu0 0
  %1270 = vmatpush1.bf16.msra.mxu0 0
  %1271 = vmatprep.subr.bf16.mxu0 0
  %1272 = vmatpush1.bf16.msra.mxu0 0
  %1273 = vmatprep.subr.bf16.mxu0 0
  %1274 = vmatpush1.bf16.msra.mxu0 0
  %1275 = vmatprep.subr.bf16.mxu0 0
  %1276 = vmatpush1.bf16.msra.mxu0 0
  %1277 = vmatprep.subr.bf16.mxu0 0
  %1278 = vmatpush1.bf16.msra.mxu0 0
  %1279 = vmatprep.subr.bf16.mxu0 0
  %1280 = vmatpush1.bf16.msra.mxu0 0
  %1281 = vmatprep.subr.bf16.mxu0 0
  %1282 = vmatpush1.bf16.msra.mxu0 0
  %1283 = vmatprep.subr.bf16.mxu0 0
  %1284 = vmatpush1.bf16.msra.mxu0 0
  %1285 = vmatprep.mubr.bf16.mxu0 0
  %1286 = vmatmul.mubr.bf16.gmra.mrb[0].mxu0 %v1124
  %v1287 = vpop.f32.mrb[0].mxu0
  %v1288 = vadd.f32 0.0, %v1287
  %v1289 = vpop.f32.mrb[0].mxu0
  %v1290 = vadd.f32 0.0, %v1289
  %v1291 = vpop.f32.mrb[0].mxu0
  %v1292 = vadd.f32 0.0, %v1291
  %v1293 = vpop.f32.mrb[0].mxu0
  %v1294 = vadd.f32 0.0, %v1293
  %1295 = vdwg.mxu0
  %1296 = vmatprep.subr.bf16.mxu0 %v1029
  %1297 = vmatpush1.bf16.msra.mxu0 %v1028
  %1298 = vmatprep.subr.bf16.mxu0 %v1031
  %1299 = vmatpush1.bf16.msra.mxu0 %v1030
  %1300 = vmatprep.subr.bf16.mxu0 %v1033
  %1301 = vmatpush1.bf16.msra.mxu0 %v1032
  %1302 = vmatprep.subr.bf16.mxu0 %v1035
  %1303 = vmatpush1.bf16.msra.mxu0 %v1034
  %1304 = vmatprep.subr.bf16.mxu0 %v1037
  %1305 = vmatpush1.bf16.msra.mxu0 %v1036
  %1306 = vmatprep.subr.bf16.mxu0 %v1039
  %1307 = vmatpush1.bf16.msra.mxu0 %v1038
  %1308 = vmatprep.subr.bf16.mxu0 %v1041
  %1309 = vmatpush1.bf16.msra.mxu0 %v1040
  %1310 = vmatprep.subr.bf16.mxu0 %v1043
  %1311 = vmatpush1.bf16.msra.mxu0 %v1042
  %1312 = vmatprep.subr.bf16.mxu0 0
  %1313 = vmatpush1.bf16.msra.mxu0 0
  %1314 = vmatprep.subr.bf16.mxu0 0
  %1315 = vmatpush1.bf16.msra.mxu0 0
  %1316 = vmatprep.subr.bf16.mxu0 0
  %1317 = vmatpush1.bf16.msra.mxu0 0
  %1318 = vmatprep.subr.bf16.mxu0 0
  %1319 = vmatpush1.bf16.msra.mxu0 0
  %1320 = vmatprep.subr.bf16.mxu0 0
  %1321 = vmatpush1.bf16.msra.mxu0 0
  %1322 = vmatprep.subr.bf16.mxu0 0
  %1323 = vmatpush1.bf16.msra.mxu0 0
  %1324 = vmatprep.subr.bf16.mxu0 0
  %1325 = vmatpush1.bf16.msra.mxu0 0
  %1326 = vmatprep.subr.bf16.mxu0 0
  %1327 = vmatpush1.bf16.msra.mxu0 0
  %1328 = vmatprep.mubr.bf16.mxu0 0
  %1329 = vmatmul.mubr.bf16.gmra.mrb[0].mxu0 %v849
  %v1330 = vpop.f32.mrb[0].mxu0
  %v1331 = vadd.f32 %v1288, %v1330
  %v1332 = vpop.f32.mrb[0].mxu0
  %v1333 = vadd.f32 %v1290, %v1332
  %v1334 = vpop.f32.mrb[0].mxu0
  %v1335 = vadd.f32 %v1292, %v1334
  %v1336 = vpop.f32.mrb[0].mxu0
  %v1337 = vadd.f32 %v1294, %v1336
  %1338 = vdwg.mxu0
  %v1341 = vunpack.c.l.b16 %v809
  %v1342 = vunpack.c.l.b16 %v810
  %v1343 = vpack.c.b16 %v1342, %v1341
  %1345 = vmatprep.subr.bf16.mxu0 %v1175
  %1346 = vmatpush1.bf16.msra.mxu0 %v1174
  %1347 = vmatprep.subr.bf16.mxu0 %v1177
  %1348 = vmatpush1.bf16.msra.mxu0 %v1176
  %1349 = vmatprep.subr.bf16.mxu0 %v1179
  %1350 = vmatpush1.bf16.msra.mxu0 %v1178
  %1351 = vmatprep.subr.bf16.mxu0 %v1181
  %1352 = vmatpush1.bf16.msra.mxu0 %v1180
  %1353 = vmatprep.subr.bf16.mxu0 %v1183
  %1354 = vmatpush1.bf16.msra.mxu0 %v1182
  %1355 = vmatprep.subr.bf16.mxu0 %v1185
  %1356 = vmatpush1.bf16.msra.mxu0 %v1184
  %1357 = vmatprep.subr.bf16.mxu0 %v1187
  %1358 = vmatpush1.bf16.msra.mxu0 %v1186
  %1359 = vmatprep.subr.bf16.mxu0 %v1189
  %1360 = vmatpush1.bf16.msra.mxu0 %v1188
  %1361 = vmatprep.subr.bf16.mxu0 0
  %1362 = vmatpush1.bf16.msra.mxu0 0
  %1363 = vmatprep.subr.bf16.mxu0 0
  %1364 = vmatpush1.bf16.msra.mxu0 0
  %1365 = vmatprep.subr.bf16.mxu0 0
  %1366 = vmatpush1.bf16.msra.mxu0 0
  %1367 = vmatprep.subr.bf16.mxu0 0
  %1368 = vmatpush1.bf16.msra.mxu0 0
  %1369 = vmatprep.subr.bf16.mxu0 0
  %1370 = vmatpush1.bf16.msra.mxu0 0
  %1371 = vmatprep.subr.bf16.mxu0 0
  %1372 = vmatpush1.bf16.msra.mxu0 0
  %1373 = vmatprep.subr.bf16.mxu0 0
  %1374 = vmatpush1.bf16.msra.mxu0 0
  %1375 = vmatprep.subr.bf16.mxu0 0
  %1376 = vmatpush1.bf16.msra.mxu0 0
  %1377 = vmatprep.mubr.bf16.mxu0 0
  %1378 = vmatmul.mubr.bf16.gmra.mrb[0].mxu0 %v1343
  %v1379 = vpop.f32.mrb[0].mxu0
  %v1380 = vadd.f32 0.0, %v1379
  %v1381 = vpop.f32.mrb[0].mxu0
  %v1382 = vadd.f32 0.0, %v1381
  %v1383 = vpop.f32.mrb[0].mxu0
  %v1384 = vadd.f32 0.0, %v1383
  %v1385 = vpop.f32.mrb[0].mxu0
  %v1386 = vadd.f32 0.0, %v1385
  %1387 = vdwg.mxu0
  %v1388 = vadd.f32 %v1331, %v1380
  %v1389 = vadd.f32 %v1333, %v1382
  %v1390 = vadd.f32 %v1335, %v1384
  %v1391 = vadd.f32 %v1337, %v1386
  %v1392 = vmax.f32 %v1249, %v1388
  %v1393 = vmax.f32 %v1250, %v1389
  %v1394 = vmax.f32 %v1251, %v1390
  %v1395 = vmax.f32 %v1252, %v1391
  %v1396 = vmax.f32 %v1392, %v1393
  %v1397 = vmax.f32 %v1394, %v1395
  %v1399 = vlaneseq
  %v1400 = vshrl.u32 %v1399, 7
  %v1401 = vsub.s32 0, %v1400
  %v1402 = vrot.slane %v811, %v1401
  %v1404 = vadd.f32 %v1396, %v1402
  %v1405 = vadd.f32 %v1397, %v1402
  %v1406 = vmax.f32 %v1404, 0.0
  %v1407 = vmax.f32 %v1405, 0.0
  %v1408 = vpack.c.bf16 %v1406, %v1406
  %v1409 = vpack.c.bf16 %v1407, %v1407
  %v1410 = vld [vmem:[%s5] sm:$0xf]
  %v1411 = vld [vmem:[%s5 + $0x4] sm:$0xf]
  %v1412 = vld [vmem:[%s5 + $0x8] sm:$0xf]
  %v1413 = vld [vmem:[%s5 + $0xc] sm:$0xf]
  %v1414 = vld [vmem:[%s5 + $0x10] sm:$0xf]
  %v1415 = vld [vmem:[%s5 + $0x14] sm:$0xf]
  %v1416 = vld [vmem:[%s5 + $0x18] sm:$0xf]
  %v1417 = vld [vmem:[%s5 + $0x1c] sm:$0xf]
  %v1418 = vld [vmem:[%s5 + $0x20] sm:$0xf]
  %v1419 = vld [vmem:[%s5 + $0x24] sm:$0xf]
  %v1420 = vld [vmem:[%s5 + $0x28] sm:$0xf]
  %v1421 = vld [vmem:[%s5 + $0x2c] sm:$0xf]
  %v1422 = vld [vmem:[%s5 + $0x30] sm:$0xf]
  %v1423 = vld [vmem:[%s5 + $0x34] sm:$0xf]
  %v1424 = vld [vmem:[%s5 + $0x38] sm:$0xf]
  %v1425 = vld [vmem:[%s5 + $0x3c] sm:$0xf]
  %s1426 = scalar_lea.vmem %s5, 64
  %v1427 = vld [vmem:[%s1426] sm:$0xf]
  %v1428 = vld [vmem:[%s1426 + $0x4] sm:$0xf]
  %v1429 = vld [vmem:[%s1426 + $0x8] sm:$0xf]
  %v1430 = vld [vmem:[%s1426 + $0xc] sm:$0xf]
  %v1431 = vld [vmem:[%s1426 + $0x10] sm:$0xf]
  %v1432 = vld [vmem:[%s1426 + $0x14] sm:$0xf]
  %v1433 = vld [vmem:[%s1426 + $0x18] sm:$0xf]
  %v1434 = vld [vmem:[%s1426 + $0x1c] sm:$0xf]
  %v1435 = vld [vmem:[%s1426 + $0x20] sm:$0xf]
  %v1436 = vld [vmem:[%s1426 + $0x24] sm:$0xf]
  %v1437 = vld [vmem:[%s1426 + $0x28] sm:$0xf]
  %v1438 = vld [vmem:[%s1426 + $0x2c] sm:$0xf]
  %v1439 = vld [vmem:[%s1426 + $0x30] sm:$0xf]
  %v1440 = vld [vmem:[%s1426 + $0x34] sm:$0xf]
  %v1441 = vld [vmem:[%s1426 + $0x38] sm:$0xf]
  %v1442 = vld [vmem:[%s1426 + $0x3c] sm:$0xf]
  %v1445 = vunpack.c.l.b16 %v1408
  %v1446 = vunpack.c.l.b16 %v1409
  %v1447 = vrot.slane %v1445, 1
  %vm1448 = vcmask 1041409
  %v1449 = vsel %vm1448, %v1446, %v1447
  %v1450 = vpack.c.b16 %v1449, %v1449
  %v1468 = vunpack.c.l.b16 %v1427
  %v1469 = vunpack.c.l.b16 %v1428
  %v1470 = vunpack.c.l.b16 %v1429
  %v1471 = vunpack.c.l.b16 %v1430
  %v1472 = vunpack.c.l.b16 %v1431
  %v1473 = vunpack.c.l.b16 %v1432
  %v1474 = vunpack.c.l.b16 %v1433
  %v1475 = vunpack.c.l.b16 %v1434
  %v1476 = vunpack.c.l.b16 %v1435
  %v1477 = vunpack.c.l.b16 %v1436
  %v1478 = vunpack.c.l.b16 %v1437
  %v1479 = vunpack.c.l.b16 %v1438
  %v1480 = vunpack.c.l.b16 %v1439
  %v1481 = vunpack.c.l.b16 %v1440
  %v1482 = vunpack.c.l.b16 %v1441
  %v1483 = vunpack.c.l.b16 %v1442
  %v1484 = vpack.c.b16 %v1469, %v1468
  %v1485 = vpack.c.b16 %v1471, %v1470
  %v1486 = vpack.c.b16 %v1473, %v1472
  %v1487 = vpack.c.b16 %v1475, %v1474
  %v1488 = vpack.c.b16 %v1477, %v1476
  %v1489 = vpack.c.b16 %v1479, %v1478
  %v1490 = vpack.c.b16 %v1481, %v1480
  %v1491 = vpack.c.b16 %v1483, %v1482
  %1500 = vmatprep.subr.bf16.mxu0 0
  %1501 = vmatpush1.bf16.msra.mxu0 %v1484
  %1502 = vmatprep.subr.bf16.mxu0 0
  %1503 = vmatpush1.bf16.msra.mxu0 %v1485
  %1504 = vmatprep.subr.bf16.mxu0 0
  %1505 = vmatpush1.bf16.msra.mxu0 %v1486
  %1506 = vmatprep.subr.bf16.mxu0 0
  %1507 = vmatpush1.bf16.msra.mxu0 %v1487
  %1508 = vmatprep.subr.bf16.mxu0 0
  %1509 = vmatpush1.bf16.msra.mxu0 %v1488
  %1510 = vmatprep.subr.bf16.mxu0 0
  %1511 = vmatpush1.bf16.msra.mxu0 %v1489
  %1512 = vmatprep.subr.bf16.mxu0 0
  %1513 = vmatpush1.bf16.msra.mxu0 %v1490
  %1514 = vmatprep.subr.bf16.mxu0 0
  %1515 = vmatpush1.bf16.msra.mxu0 %v1491
  %1516 = vmatprep.subr.bf16.mxu0 0
  %1517 = vmatpush1.bf16.msra.mxu0 0
  %1518 = vmatprep.subr.bf16.mxu0 0
  %1519 = vmatpush1.bf16.msra.mxu0 0
  %1520 = vmatprep.subr.bf16.mxu0 0
  %1521 = vmatpush1.bf16.msra.mxu0 0
  %1522 = vmatprep.subr.bf16.mxu0 0
  %1523 = vmatpush1.bf16.msra.mxu0 0
  %1524 = vmatprep.subr.bf16.mxu0 0
  %1525 = vmatpush1.bf16.msra.mxu0 0
  %1526 = vmatprep.subr.bf16.mxu0 0
  %1527 = vmatpush1.bf16.msra.mxu0 0
  %1528 = vmatprep.subr.bf16.mxu0 0
  %1529 = vmatpush1.bf16.msra.mxu0 0
  %1530 = vmatprep.subr.bf16.mxu0 0
  %1531 = vmatpush1.bf16.msra.mxu0 0
  %1532 = vmatprep.mubr.bf16.mxu0 0
  %1533 = vmatmul.mubr.bf16.gmra.mrb[0].mxu0 %v1450
  %v1534 = vpop.f32.mrb[0].mxu0
  %v1535 = vadd.f32 0.0, %v1534
  %v1536 = vpop.f32.mrb[0].mxu0
  %v1537 = vpop.f32.mrb[0].mxu0
  %v1538 = vpop.f32.mrb[0].mxu0
  %1539 = vdwg.mxu0
  %v1540 = vrot.slane %v1446, 7
  %v1541 = vsel %vm1448, %v1540, %v1445
  %v1542 = vpack.c.b16 %v1541, %v1541
  %v1560 = vunpack.c.l.b16 %v1410
  %v1561 = vunpack.c.l.b16 %v1411
  %v1562 = vunpack.c.l.b16 %v1412
  %v1563 = vunpack.c.l.b16 %v1413
  %v1564 = vunpack.c.l.b16 %v1414
  %v1565 = vunpack.c.l.b16 %v1415
  %v1566 = vunpack.c.l.b16 %v1416
  %v1567 = vunpack.c.l.b16 %v1417
  %v1568 = vunpack.c.l.b16 %v1418
  %v1569 = vunpack.c.l.b16 %v1419
  %v1570 = vunpack.c.l.b16 %v1420
  %v1571 = vunpack.c.l.b16 %v1421
  %v1572 = vunpack.c.l.b16 %v1422
  %v1573 = vunpack.c.l.b16 %v1423
  %v1574 = vunpack.c.l.b16 %v1424
  %v1575 = vunpack.c.l.b16 %v1425
  %v1576 = vpack.c.b16 %v1561, %v1560
  %v1577 = vpack.c.b16 %v1563, %v1562
  %v1578 = vpack.c.b16 %v1565, %v1564
  %v1579 = vpack.c.b16 %v1567, %v1566
  %v1580 = vpack.c.b16 %v1569, %v1568
  %v1581 = vpack.c.b16 %v1571, %v1570
  %v1582 = vpack.c.b16 %v1573, %v1572
  %v1583 = vpack.c.b16 %v1575, %v1574
  %1592 = vmatprep.subr.bf16.mxu0 0
  %1593 = vmatpush1.bf16.msra.mxu0 %v1576
  %1594 = vmatprep.subr.bf16.mxu0 0
  %1595 = vmatpush1.bf16.msra.mxu0 %v1577
  %1596 = vmatprep.subr.bf16.mxu0 0
  %1597 = vmatpush1.bf16.msra.mxu0 %v1578
  %1598 = vmatprep.subr.bf16.mxu0 0
  %1599 = vmatpush1.bf16.msra.mxu0 %v1579
  %1600 = vmatprep.subr.bf16.mxu0 0
  %1601 = vmatpush1.bf16.msra.mxu0 %v1580
  %1602 = vmatprep.subr.bf16.mxu0 0
  %1603 = vmatpush1.bf16.msra.mxu0 %v1581
  %1604 = vmatprep.subr.bf16.mxu0 0
  %1605 = vmatpush1.bf16.msra.mxu0 %v1582
  %1606 = vmatprep.subr.bf16.mxu0 0
  %1607 = vmatpush1.bf16.msra.mxu0 %v1583
  %1608 = vmatprep.subr.bf16.mxu0 0
  %1609 = vmatpush1.bf16.msra.mxu0 0
  %1610 = vmatprep.subr.bf16.mxu0 0
  %1611 = vmatpush1.bf16.msra.mxu0 0
  %1612 = vmatprep.subr.bf16.mxu0 0
  %1613 = vmatpush1.bf16.msra.mxu0 0
  %1614 = vmatprep.subr.bf16.mxu0 0
  %1615 = vmatpush1.bf16.msra.mxu0 0
  %1616 = vmatprep.subr.bf16.mxu0 0
  %1617 = vmatpush1.bf16.msra.mxu0 0
  %1618 = vmatprep.subr.bf16.mxu0 0
  %1619 = vmatpush1.bf16.msra.mxu0 0
  %1620 = vmatprep.subr.bf16.mxu0 0
  %1621 = vmatpush1.bf16.msra.mxu0 0
  %1622 = vmatprep.subr.bf16.mxu0 0
  %1623 = vmatpush1.bf16.msra.mxu0 0
  %1624 = vmatprep.mubr.bf16.mxu0 0
  %1625 = vmatmul.mubr.bf16.gmra.mrb[0].mxu0 %v1542
  %v1626 = vpop.f32.mrb[0].mxu0
  %v1627 = vadd.f32 %v1535, %v1626
  %v1628 = vpop.f32.mrb[0].mxu0
  %v1629 = vpop.f32.mrb[0].mxu0
  %v1630 = vpop.f32.mrb[0].mxu0
  %1631 = vdwg.mxu0
  %s1632 = scalar_lea.vmem %s5, 128
  %v1633 = vld [vmem:[%s1632] sm:$0xf]
  %v1634 = vld [vmem:[%s1632 + $0x4] sm:$0xf]
  %v1635 = vld [vmem:[%s1632 + $0x8] sm:$0xf]
  %v1636 = vld [vmem:[%s1632 + $0xc] sm:$0xf]
  %v1637 = vld [vmem:[%s1632 + $0x10] sm:$0xf]
  %v1638 = vld [vmem:[%s1632 + $0x14] sm:$0xf]
  %v1639 = vld [vmem:[%s1632 + $0x18] sm:$0xf]
  %v1640 = vld [vmem:[%s1632 + $0x1c] sm:$0xf]
  %v1641 = vld [vmem:[%s1632 + $0x20] sm:$0xf]
  %v1642 = vld [vmem:[%s1632 + $0x24] sm:$0xf]
  %v1643 = vld [vmem:[%s1632 + $0x28] sm:$0xf]
  %v1644 = vld [vmem:[%s1632 + $0x2c] sm:$0xf]
  %v1645 = vld [vmem:[%s1632 + $0x30] sm:$0xf]
  %v1646 = vld [vmem:[%s1632 + $0x34] sm:$0xf]
  %v1647 = vld [vmem:[%s1632 + $0x38] sm:$0xf]
  %v1648 = vld [vmem:[%s1632 + $0x3c] sm:$0xf]
  %v1649 = vrot.slane %v1445, 2
  %v1650 = vrot.slane %v1446, 1
  %v1651 = vsel %vm1448, %v1650, %v1649
  %v1652 = vpack.c.b16 %v1651, %v1651
  %v1670 = vunpack.c.l.b16 %v1633
  %v1671 = vunpack.c.l.b16 %v1634
  %v1672 = vunpack.c.l.b16 %v1635
  %v1673 = vunpack.c.l.b16 %v1636
  %v1674 = vunpack.c.l.b16 %v1637
  %v1675 = vunpack.c.l.b16 %v1638
  %v1676 = vunpack.c.l.b16 %v1639
  %v1677 = vunpack.c.l.b16 %v1640
  %v1678 = vunpack.c.l.b16 %v1641
  %v1679 = vunpack.c.l.b16 %v1642
  %v1680 = vunpack.c.l.b16 %v1643
  %v1681 = vunpack.c.l.b16 %v1644
  %v1682 = vunpack.c.l.b16 %v1645
  %v1683 = vunpack.c.l.b16 %v1646
  %v1684 = vunpack.c.l.b16 %v1647
  %v1685 = vunpack.c.l.b16 %v1648
  %v1686 = vpack.c.b16 %v1671, %v1670
  %v1687 = vpack.c.b16 %v1673, %v1672
  %v1688 = vpack.c.b16 %v1675, %v1674
  %v1689 = vpack.c.b16 %v1677, %v1676
  %v1690 = vpack.c.b16 %v1679, %v1678
  %v1691 = vpack.c.b16 %v1681, %v1680
  %v1692 = vpack.c.b16 %v1683, %v1682
  %v1693 = vpack.c.b16 %v1685, %v1684
  %1702 = vmatprep.subr.bf16.mxu0 0
  %1703 = vmatpush1.bf16.msra.mxu0 %v1686
  %1704 = vmatprep.subr.bf16.mxu0 0
  %1705 = vmatpush1.bf16.msra.mxu0 %v1687
  %1706 = vmatprep.subr.bf16.mxu0 0
  %1707 = vmatpush1.bf16.msra.mxu0 %v1688
  %1708 = vmatprep.subr.bf16.mxu0 0
  %1709 = vmatpush1.bf16.msra.mxu0 %v1689
  %1710 = vmatprep.subr.bf16.mxu0 0
  %1711 = vmatpush1.bf16.msra.mxu0 %v1690
  %1712 = vmatprep.subr.bf16.mxu0 0
  %1713 = vmatpush1.bf16.msra.mxu0 %v1691
  %1714 = vmatprep.subr.bf16.mxu0 0
  %1715 = vmatpush1.bf16.msra.mxu0 %v1692
  %1716 = vmatprep.subr.bf16.mxu0 0
  %1717 = vmatpush1.bf16.msra.mxu0 %v1693
  %1718 = vmatprep.subr.bf16.mxu0 0
  %1719 = vmatpush1.bf16.msra.mxu0 0
  %1720 = vmatprep.subr.bf16.mxu0 0
  %1721 = vmatpush1.bf16.msra.mxu0 0
  %1722 = vmatprep.subr.bf16.mxu0 0
  %1723 = vmatpush1.bf16.msra.mxu0 0
  %1724 = vmatprep.subr.bf16.mxu0 0
  %1725 = vmatpush1.bf16.msra.mxu0 0
  %1726 = vmatprep.subr.bf16.mxu0 0
  %1727 = vmatpush1.bf16.msra.mxu0 0
  %1728 = vmatprep.subr.bf16.mxu0 0
  %1729 = vmatpush1.bf16.msra.mxu0 0
  %1730 = vmatprep.subr.bf16.mxu0 0
  %1731 = vmatpush1.bf16.msra.mxu0 0
  %1732 = vmatprep.subr.bf16.mxu0 0
  %1733 = vmatpush1.bf16.msra.mxu0 0
  %1734 = vmatprep.mubr.bf16.mxu0 0
  %1735 = vmatmul.mubr.bf16.gmra.mrb[0].mxu0 %v1652
  %v1736 = vpop.f32.mrb[0].mxu0
  %v1737 = vadd.f32 0.0, %v1736
  %v1738 = vpop.f32.mrb[0].mxu0
  %v1739 = vpop.f32.mrb[0].mxu0
  %v1740 = vpop.f32.mrb[0].mxu0
  %1741 = vdwg.mxu0
  %v1742 = vadd.f32 %v1627, %v1737
  %s1743 = scalar_lea.vmem %s5, 192
  %v1744 = vld [vmem:[%s1743] sm:$0xf]
  %v1745 = vld [vmem:[%s1743 + $0x4] sm:$0xf]
  %v1746 = vld [vmem:[%s1743 + $0x8] sm:$0xf]
  %v1747 = vld [vmem:[%s1743 + $0xc] sm:$0xf]
  %v1748 = vld [vmem:[%s1743 + $0x10] sm:$0xf]
  %v1749 = vld [vmem:[%s1743 + $0x14] sm:$0xf]
  %v1750 = vld [vmem:[%s1743 + $0x18] sm:$0xf]
  %v1751 = vld [vmem:[%s1743 + $0x1c] sm:$0xf]
  %v1752 = vld [vmem:[%s1743 + $0x20] sm:$0xf]
  %v1753 = vld [vmem:[%s1743 + $0x24] sm:$0xf]
  %v1754 = vld [vmem:[%s1743 + $0x28] sm:$0xf]
  %v1755 = vld [vmem:[%s1743 + $0x2c] sm:$0xf]
  %v1756 = vld [vmem:[%s1743 + $0x30] sm:$0xf]
  %v1757 = vld [vmem:[%s1743 + $0x34] sm:$0xf]
  %v1758 = vld [vmem:[%s1743 + $0x38] sm:$0xf]
  %v1759 = vld [vmem:[%s1743 + $0x3c] sm:$0xf]
  %v1760 = vrot.slane %v1445, 3
  %v1761 = vrot.slane %v1446, 2
  %v1762 = vsel %vm1448, %v1761, %v1760
  %v1763 = vpack.c.b16 %v1762, %v1762
  %v1781 = vunpack.c.l.b16 %v1744
  %v1782 = vunpack.c.l.b16 %v1745
  %v1783 = vunpack.c.l.b16 %v1746
  %v1784 = vunpack.c.l.b16 %v1747
  %v1785 = vunpack.c.l.b16 %v1748
  %v1786 = vunpack.c.l.b16 %v1749
  %v1787 = vunpack.c.l.b16 %v1750
  %v1788 = vunpack.c.l.b16 %v1751
  %v1789 = vunpack.c.l.b16 %v1752
  %v1790 = vunpack.c.l.b16 %v1753
  %v1791 = vunpack.c.l.b16 %v1754
  %v1792 = vunpack.c.l.b16 %v1755
  %v1793 = vunpack.c.l.b16 %v1756
  %v1794 = vunpack.c.l.b16 %v1757
  %v1795 = vunpack.c.l.b16 %v1758
  %v1796 = vunpack.c.l.b16 %v1759
  %v1797 = vpack.c.b16 %v1782, %v1781
  %v1798 = vpack.c.b16 %v1784, %v1783
  %v1799 = vpack.c.b16 %v1786, %v1785
  %v1800 = vpack.c.b16 %v1788, %v1787
  %v1801 = vpack.c.b16 %v1790, %v1789
  %v1802 = vpack.c.b16 %v1792, %v1791
  %v1803 = vpack.c.b16 %v1794, %v1793
  %v1804 = vpack.c.b16 %v1796, %v1795
  %1813 = vmatprep.subr.bf16.mxu0 0
  %1814 = vmatpush1.bf16.msra.mxu0 %v1797
  %1815 = vmatprep.subr.bf16.mxu0 0
  %1816 = vmatpush1.bf16.msra.mxu0 %v1798
  %1817 = vmatprep.subr.bf16.mxu0 0
  %1818 = vmatpush1.bf16.msra.mxu0 %v1799
  %1819 = vmatprep.subr.bf16.mxu0 0
  %1820 = vmatpush1.bf16.msra.mxu0 %v1800
  %1821 = vmatprep.subr.bf16.mxu0 0
  %1822 = vmatpush1.bf16.msra.mxu0 %v1801
  %1823 = vmatprep.subr.bf16.mxu0 0
  %1824 = vmatpush1.bf16.msra.mxu0 %v1802
  %1825 = vmatprep.subr.bf16.mxu0 0
  %1826 = vmatpush1.bf16.msra.mxu0 %v1803
  %1827 = vmatprep.subr.bf16.mxu0 0
  %1828 = vmatpush1.bf16.msra.mxu0 %v1804
  %1829 = vmatprep.subr.bf16.mxu0 0
  %1830 = vmatpush1.bf16.msra.mxu0 0
  %1831 = vmatprep.subr.bf16.mxu0 0
  %1832 = vmatpush1.bf16.msra.mxu0 0
  %1833 = vmatprep.subr.bf16.mxu0 0
  %1834 = vmatpush1.bf16.msra.mxu0 0
  %1835 = vmatprep.subr.bf16.mxu0 0
  %1836 = vmatpush1.bf16.msra.mxu0 0
  %1837 = vmatprep.subr.bf16.mxu0 0
  %1838 = vmatpush1.bf16.msra.mxu0 0
  %1839 = vmatprep.subr.bf16.mxu0 0
  %1840 = vmatpush1.bf16.msra.mxu0 0
  %1841 = vmatprep.subr.bf16.mxu0 0
  %1842 = vmatpush1.bf16.msra.mxu0 0
  %1843 = vmatprep.subr.bf16.mxu0 0
  %1844 = vmatpush1.bf16.msra.mxu0 0
  %1845 = vmatprep.mubr.bf16.mxu0 0
  %1846 = vmatmul.mubr.bf16.gmra.mrb[0].mxu0 %v1763
  %v1847 = vpop.f32.mrb[0].mxu0
  %v1848 = vadd.f32 0.0, %v1847
  %v1849 = vpop.f32.mrb[0].mxu0
  %v1850 = vpop.f32.mrb[0].mxu0
  %v1851 = vpop.f32.mrb[0].mxu0
  %1852 = vdwg.mxu0
  %v1853 = vadd.f32 %v1742, %v1848
  %s1854 = scalar_lea.vmem %s5, 256
  %v1855 = vld [vmem:[%s1854] sm:$0xf]
  %v1856 = vld [vmem:[%s1854 + $0x4] sm:$0xf]
  %v1857 = vld [vmem:[%s1854 + $0x8] sm:$0xf]
  %v1858 = vld [vmem:[%s1854 + $0xc] sm:$0xf]
  %v1859 = vld [vmem:[%s1854 + $0x10] sm:$0xf]
  %v1860 = vld [vmem:[%s1854 + $0x14] sm:$0xf]
  %v1861 = vld [vmem:[%s1854 + $0x18] sm:$0xf]
  %v1862 = vld [vmem:[%s1854 + $0x1c] sm:$0xf]
  %v1863 = vld [vmem:[%s1854 + $0x20] sm:$0xf]
  %v1864 = vld [vmem:[%s1854 + $0x24] sm:$0xf]
  %v1865 = vld [vmem:[%s1854 + $0x28] sm:$0xf]
  %v1866 = vld [vmem:[%s1854 + $0x2c] sm:$0xf]
  %v1867 = vld [vmem:[%s1854 + $0x30] sm:$0xf]
  %v1868 = vld [vmem:[%s1854 + $0x34] sm:$0xf]
  %v1869 = vld [vmem:[%s1854 + $0x38] sm:$0xf]
  %v1870 = vld [vmem:[%s1854 + $0x3c] sm:$0xf]
  %v1871 = vrot.slane %v1445, 4
  %v1872 = vrot.slane %v1446, 3
  %v1873 = vsel %vm1448, %v1872, %v1871
  %v1874 = vpack.c.b16 %v1873, %v1873
  %v1892 = vunpack.c.l.b16 %v1855
  %v1893 = vunpack.c.l.b16 %v1856
  %v1894 = vunpack.c.l.b16 %v1857
  %v1895 = vunpack.c.l.b16 %v1858
  %v1896 = vunpack.c.l.b16 %v1859
  %v1897 = vunpack.c.l.b16 %v1860
  %v1898 = vunpack.c.l.b16 %v1861
  %v1899 = vunpack.c.l.b16 %v1862
  %v1900 = vunpack.c.l.b16 %v1863
  %v1901 = vunpack.c.l.b16 %v1864
  %v1902 = vunpack.c.l.b16 %v1865
  %v1903 = vunpack.c.l.b16 %v1866
  %v1904 = vunpack.c.l.b16 %v1867
  %v1905 = vunpack.c.l.b16 %v1868
  %v1906 = vunpack.c.l.b16 %v1869
  %v1907 = vunpack.c.l.b16 %v1870
  %v1908 = vpack.c.b16 %v1893, %v1892
  %v1909 = vpack.c.b16 %v1895, %v1894
  %v1910 = vpack.c.b16 %v1897, %v1896
  %v1911 = vpack.c.b16 %v1899, %v1898
  %v1912 = vpack.c.b16 %v1901, %v1900
  %v1913 = vpack.c.b16 %v1903, %v1902
  %v1914 = vpack.c.b16 %v1905, %v1904
  %v1915 = vpack.c.b16 %v1907, %v1906
  %1924 = vmatprep.subr.bf16.mxu0 0
  %1925 = vmatpush1.bf16.msra.mxu0 %v1908
  %1926 = vmatprep.subr.bf16.mxu0 0
  %1927 = vmatpush1.bf16.msra.mxu0 %v1909
  %1928 = vmatprep.subr.bf16.mxu0 0
  %1929 = vmatpush1.bf16.msra.mxu0 %v1910
  %1930 = vmatprep.subr.bf16.mxu0 0
  %1931 = vmatpush1.bf16.msra.mxu0 %v1911
  %1932 = vmatprep.subr.bf16.mxu0 0
  %1933 = vmatpush1.bf16.msra.mxu0 %v1912
  %1934 = vmatprep.subr.bf16.mxu0 0
  %1935 = vmatpush1.bf16.msra.mxu0 %v1913
  %1936 = vmatprep.subr.bf16.mxu0 0
  %1937 = vmatpush1.bf16.msra.mxu0 %v1914
  %1938 = vmatprep.subr.bf16.mxu0 0
  %1939 = vmatpush1.bf16.msra.mxu0 %v1915
  %1940 = vmatprep.subr.bf16.mxu0 0
  %1941 = vmatpush1.bf16.msra.mxu0 0
  %1942 = vmatprep.subr.bf16.mxu0 0
  %1943 = vmatpush1.bf16.msra.mxu0 0
  %1944 = vmatprep.subr.bf16.mxu0 0
  %1945 = vmatpush1.bf16.msra.mxu0 0
  %1946 = vmatprep.subr.bf16.mxu0 0
  %1947 = vmatpush1.bf16.msra.mxu0 0
  %1948 = vmatprep.subr.bf16.mxu0 0
  %1949 = vmatpush1.bf16.msra.mxu0 0
  %1950 = vmatprep.subr.bf16.mxu0 0
  %1951 = vmatpush1.bf16.msra.mxu0 0
  %1952 = vmatprep.subr.bf16.mxu0 0
  %1953 = vmatpush1.bf16.msra.mxu0 0
  %1954 = vmatprep.subr.bf16.mxu0 0
  %1955 = vmatpush1.bf16.msra.mxu0 0
  %1956 = vmatprep.mubr.bf16.mxu0 0
  %1957 = vmatmul.mubr.bf16.gmra.mrb[0].mxu0 %v1874
  %v1958 = vpop.f32.mrb[0].mxu0
  %v1959 = vadd.f32 0.0, %v1958
  %v1960 = vpop.f32.mrb[0].mxu0
  %v1961 = vpop.f32.mrb[0].mxu0
  %v1962 = vpop.f32.mrb[0].mxu0
  %1963 = vdwg.mxu0
  %v1964 = vadd.f32 %v1853, %v1959
  %s1965 = scalar_lea.vmem %s5, 320
  %v1966 = vld [vmem:[%s1965] sm:$0xf]
  %v1967 = vld [vmem:[%s1965 + $0x4] sm:$0xf]
  %v1968 = vld [vmem:[%s1965 + $0x8] sm:$0xf]
  %v1969 = vld [vmem:[%s1965 + $0xc] sm:$0xf]
  %v1970 = vld [vmem:[%s1965 + $0x10] sm:$0xf]
  %v1971 = vld [vmem:[%s1965 + $0x14] sm:$0xf]
  %v1972 = vld [vmem:[%s1965 + $0x18] sm:$0xf]
  %v1973 = vld [vmem:[%s1965 + $0x1c] sm:$0xf]
  %v1974 = vld [vmem:[%s1965 + $0x20] sm:$0xf]
  %v1975 = vld [vmem:[%s1965 + $0x24] sm:$0xf]
  %v1976 = vld [vmem:[%s1965 + $0x28] sm:$0xf]
  %v1977 = vld [vmem:[%s1965 + $0x2c] sm:$0xf]
  %v1978 = vld [vmem:[%s1965 + $0x30] sm:$0xf]
  %v1979 = vld [vmem:[%s1965 + $0x34] sm:$0xf]
  %v1980 = vld [vmem:[%s1965 + $0x38] sm:$0xf]
  %v1981 = vld [vmem:[%s1965 + $0x3c] sm:$0xf]
  %v1982 = vrot.slane %v1445, 5
  %v1983 = vrot.slane %v1446, 4
  %v1984 = vsel %vm1448, %v1983, %v1982
  %v1985 = vpack.c.b16 %v1984, %v1984
  %v2003 = vunpack.c.l.b16 %v1966
  %v2004 = vunpack.c.l.b16 %v1967
  %v2005 = vunpack.c.l.b16 %v1968
  %v2006 = vunpack.c.l.b16 %v1969
  %v2007 = vunpack.c.l.b16 %v1970
  %v2008 = vunpack.c.l.b16 %v1971
  %v2009 = vunpack.c.l.b16 %v1972
  %v2010 = vunpack.c.l.b16 %v1973
  %v2011 = vunpack.c.l.b16 %v1974
  %v2012 = vunpack.c.l.b16 %v1975
  %v2013 = vunpack.c.l.b16 %v1976
  %v2014 = vunpack.c.l.b16 %v1977
  %v2015 = vunpack.c.l.b16 %v1978
  %v2016 = vunpack.c.l.b16 %v1979
  %v2017 = vunpack.c.l.b16 %v1980
  %v2018 = vunpack.c.l.b16 %v1981
  %v2019 = vpack.c.b16 %v2004, %v2003
  %v2020 = vpack.c.b16 %v2006, %v2005
  %v2021 = vpack.c.b16 %v2008, %v2007
  %v2022 = vpack.c.b16 %v2010, %v2009
  %v2023 = vpack.c.b16 %v2012, %v2011
  %v2024 = vpack.c.b16 %v2014, %v2013
  %v2025 = vpack.c.b16 %v2016, %v2015
  %v2026 = vpack.c.b16 %v2018, %v2017
  %2035 = vmatprep.subr.bf16.mxu0 0
  %2036 = vmatpush1.bf16.msra.mxu0 %v2019
  %2037 = vmatprep.subr.bf16.mxu0 0
  %2038 = vmatpush1.bf16.msra.mxu0 %v2020
  %2039 = vmatprep.subr.bf16.mxu0 0
  %2040 = vmatpush1.bf16.msra.mxu0 %v2021
  %2041 = vmatprep.subr.bf16.mxu0 0
  %2042 = vmatpush1.bf16.msra.mxu0 %v2022
  %2043 = vmatprep.subr.bf16.mxu0 0
  %2044 = vmatpush1.bf16.msra.mxu0 %v2023
  %2045 = vmatprep.subr.bf16.mxu0 0
  %2046 = vmatpush1.bf16.msra.mxu0 %v2024
  %2047 = vmatprep.subr.bf16.mxu0 0
  %2048 = vmatpush1.bf16.msra.mxu0 %v2025
  %2049 = vmatprep.subr.bf16.mxu0 0
  %2050 = vmatpush1.bf16.msra.mxu0 %v2026
  %2051 = vmatprep.subr.bf16.mxu0 0
  %2052 = vmatpush1.bf16.msra.mxu0 0
  %2053 = vmatprep.subr.bf16.mxu0 0
  %2054 = vmatpush1.bf16.msra.mxu0 0
  %2055 = vmatprep.subr.bf16.mxu0 0
  %2056 = vmatpush1.bf16.msra.mxu0 0
  %2057 = vmatprep.subr.bf16.mxu0 0
  %2058 = vmatpush1.bf16.msra.mxu0 0
  %2059 = vmatprep.subr.bf16.mxu0 0
  %2060 = vmatpush1.bf16.msra.mxu0 0
  %2061 = vmatprep.subr.bf16.mxu0 0
  %2062 = vmatpush1.bf16.msra.mxu0 0
  %2063 = vmatprep.subr.bf16.mxu0 0
  %2064 = vmatpush1.bf16.msra.mxu0 0
  %2065 = vmatprep.subr.bf16.mxu0 0
  %2066 = vmatpush1.bf16.msra.mxu0 0
  %2067 = vmatprep.mubr.bf16.mxu0 0
  %2068 = vmatmul.mubr.bf16.gmra.mrb[0].mxu0 %v1985
  %v2069 = vpop.f32.mrb[0].mxu0
  %v2070 = vadd.f32 0.0, %v2069
  %v2071 = vpop.f32.mrb[0].mxu0
  %v2072 = vpop.f32.mrb[0].mxu0
  %v2073 = vpop.f32.mrb[0].mxu0
  %2074 = vdwg.mxu0
  %v2075 = vadd.f32 %v1964, %v2070
  %s2076 = scalar_lea.vmem %s5, 384
  %v2077 = vld [vmem:[%s2076] sm:$0xf]
  %v2078 = vld [vmem:[%s2076 + $0x4] sm:$0xf]
  %v2079 = vld [vmem:[%s2076 + $0x8] sm:$0xf]
  %v2080 = vld [vmem:[%s2076 + $0xc] sm:$0xf]
  %v2081 = vld [vmem:[%s2076 + $0x10] sm:$0xf]
  %v2082 = vld [vmem:[%s2076 + $0x14] sm:$0xf]
  %v2083 = vld [vmem:[%s2076 + $0x18] sm:$0xf]
  %v2084 = vld [vmem:[%s2076 + $0x1c] sm:$0xf]
  %v2085 = vld [vmem:[%s2076 + $0x20] sm:$0xf]
  %v2086 = vld [vmem:[%s2076 + $0x24] sm:$0xf]
  %v2087 = vld [vmem:[%s2076 + $0x28] sm:$0xf]
  %v2088 = vld [vmem:[%s2076 + $0x2c] sm:$0xf]
  %v2089 = vld [vmem:[%s2076 + $0x30] sm:$0xf]
  %v2090 = vld [vmem:[%s2076 + $0x34] sm:$0xf]
  %v2091 = vld [vmem:[%s2076 + $0x38] sm:$0xf]
  %v2092 = vld [vmem:[%s2076 + $0x3c] sm:$0xf]
  %v2093 = vrot.slane %v1445, 6
  %v2094 = vrot.slane %v1446, 5
  %v2095 = vsel %vm1448, %v2094, %v2093
  %v2096 = vpack.c.b16 %v2095, %v2095
  %v2114 = vunpack.c.l.b16 %v2077
  %v2115 = vunpack.c.l.b16 %v2078
  %v2116 = vunpack.c.l.b16 %v2079
  %v2117 = vunpack.c.l.b16 %v2080
  %v2118 = vunpack.c.l.b16 %v2081
  %v2119 = vunpack.c.l.b16 %v2082
  %v2120 = vunpack.c.l.b16 %v2083
  %v2121 = vunpack.c.l.b16 %v2084
  %v2122 = vunpack.c.l.b16 %v2085
  %v2123 = vunpack.c.l.b16 %v2086
  %v2124 = vunpack.c.l.b16 %v2087
  %v2125 = vunpack.c.l.b16 %v2088
  %v2126 = vunpack.c.l.b16 %v2089
  %v2127 = vunpack.c.l.b16 %v2090
  %v2128 = vunpack.c.l.b16 %v2091
  %v2129 = vunpack.c.l.b16 %v2092
  %v2130 = vpack.c.b16 %v2115, %v2114
  %v2131 = vpack.c.b16 %v2117, %v2116
  %v2132 = vpack.c.b16 %v2119, %v2118
  %v2133 = vpack.c.b16 %v2121, %v2120
  %v2134 = vpack.c.b16 %v2123, %v2122
  %v2135 = vpack.c.b16 %v2125, %v2124
  %v2136 = vpack.c.b16 %v2127, %v2126
  %v2137 = vpack.c.b16 %v2129, %v2128
  %2146 = vmatprep.subr.bf16.mxu0 0
  %2147 = vmatpush1.bf16.msra.mxu0 %v2130
  %2148 = vmatprep.subr.bf16.mxu0 0
  %2149 = vmatpush1.bf16.msra.mxu0 %v2131
  %2150 = vmatprep.subr.bf16.mxu0 0
  %2151 = vmatpush1.bf16.msra.mxu0 %v2132
  %2152 = vmatprep.subr.bf16.mxu0 0
  %2153 = vmatpush1.bf16.msra.mxu0 %v2133
  %2154 = vmatprep.subr.bf16.mxu0 0
  %2155 = vmatpush1.bf16.msra.mxu0 %v2134
  %2156 = vmatprep.subr.bf16.mxu0 0
  %2157 = vmatpush1.bf16.msra.mxu0 %v2135
  %2158 = vmatprep.subr.bf16.mxu0 0
  %2159 = vmatpush1.bf16.msra.mxu0 %v2136
  %2160 = vmatprep.subr.bf16.mxu0 0
  %2161 = vmatpush1.bf16.msra.mxu0 %v2137
  %2162 = vmatprep.subr.bf16.mxu0 0
  %2163 = vmatpush1.bf16.msra.mxu0 0
  %2164 = vmatprep.subr.bf16.mxu0 0
  %2165 = vmatpush1.bf16.msra.mxu0 0
  %2166 = vmatprep.subr.bf16.mxu0 0
  %2167 = vmatpush1.bf16.msra.mxu0 0
  %2168 = vmatprep.subr.bf16.mxu0 0
  %2169 = vmatpush1.bf16.msra.mxu0 0
  %2170 = vmatprep.subr.bf16.mxu0 0
  %2171 = vmatpush1.bf16.msra.mxu0 0
  %2172 = vmatprep.subr.bf16.mxu0 0
  %2173 = vmatpush1.bf16.msra.mxu0 0
  %2174 = vmatprep.subr.bf16.mxu0 0
  %2175 = vmatpush1.bf16.msra.mxu0 0
  %2176 = vmatprep.subr.bf16.mxu0 0
  %2177 = vmatpush1.bf16.msra.mxu0 0
  %2178 = vmatprep.mubr.bf16.mxu0 0
  %2179 = vmatmul.mubr.bf16.gmra.mrb[0].mxu0 %v2096
  %v2180 = vpop.f32.mrb[0].mxu0
  %v2181 = vadd.f32 0.0, %v2180
  %v2182 = vpop.f32.mrb[0].mxu0
  %v2183 = vpop.f32.mrb[0].mxu0
  %v2184 = vpop.f32.mrb[0].mxu0
  %2185 = vdwg.mxu0
  %v2186 = vadd.f32 %v2075, %v2181
  %s2187 = scalar_lea.vmem %s5, 448
  %v2188 = vld [vmem:[%s2187] sm:$0xf]
  %v2189 = vld [vmem:[%s2187 + $0x4] sm:$0xf]
  %v2190 = vld [vmem:[%s2187 + $0x8] sm:$0xf]
  %v2191 = vld [vmem:[%s2187 + $0xc] sm:$0xf]
  %v2192 = vld [vmem:[%s2187 + $0x10] sm:$0xf]
  %v2193 = vld [vmem:[%s2187 + $0x14] sm:$0xf]
  %v2194 = vld [vmem:[%s2187 + $0x18] sm:$0xf]
  %v2195 = vld [vmem:[%s2187 + $0x1c] sm:$0xf]
  %v2196 = vld [vmem:[%s2187 + $0x20] sm:$0xf]
  %v2197 = vld [vmem:[%s2187 + $0x24] sm:$0xf]
  %v2198 = vld [vmem:[%s2187 + $0x28] sm:$0xf]
  %v2199 = vld [vmem:[%s2187 + $0x2c] sm:$0xf]
  %v2200 = vld [vmem:[%s2187 + $0x30] sm:$0xf]
  %v2201 = vld [vmem:[%s2187 + $0x34] sm:$0xf]
  %v2202 = vld [vmem:[%s2187 + $0x38] sm:$0xf]
  %v2203 = vld [vmem:[%s2187 + $0x3c] sm:$0xf]
  %v2204 = vrot.slane %v1445, 7
  %v2205 = vrot.slane %v1446, 6
  %v2206 = vsel %vm1448, %v2205, %v2204
  %v2207 = vpack.c.b16 %v2206, %v2206
  %v2225 = vunpack.c.l.b16 %v2188
  %v2226 = vunpack.c.l.b16 %v2189
  %v2227 = vunpack.c.l.b16 %v2190
  %v2228 = vunpack.c.l.b16 %v2191
  %v2229 = vunpack.c.l.b16 %v2192
  %v2230 = vunpack.c.l.b16 %v2193
  %v2231 = vunpack.c.l.b16 %v2194
  %v2232 = vunpack.c.l.b16 %v2195
  %v2233 = vunpack.c.l.b16 %v2196
  %v2234 = vunpack.c.l.b16 %v2197
  %v2235 = vunpack.c.l.b16 %v2198
  %v2236 = vunpack.c.l.b16 %v2199
  %v2237 = vunpack.c.l.b16 %v2200
  %v2238 = vunpack.c.l.b16 %v2201
  %v2239 = vunpack.c.l.b16 %v2202
  %v2240 = vunpack.c.l.b16 %v2203
  %v2241 = vpack.c.b16 %v2226, %v2225
  %v2242 = vpack.c.b16 %v2228, %v2227
  %v2243 = vpack.c.b16 %v2230, %v2229
  %v2244 = vpack.c.b16 %v2232, %v2231
  %v2245 = vpack.c.b16 %v2234, %v2233
  %v2246 = vpack.c.b16 %v2236, %v2235
  %v2247 = vpack.c.b16 %v2238, %v2237
  %v2248 = vpack.c.b16 %v2240, %v2239
  %2257 = vmatprep.subr.bf16.mxu0 0
  %2258 = vmatpush1.bf16.msra.mxu0 %v2241
  %2259 = vmatprep.subr.bf16.mxu0 0
  %2260 = vmatpush1.bf16.msra.mxu0 %v2242
  %2261 = vmatprep.subr.bf16.mxu0 0
  %2262 = vmatpush1.bf16.msra.mxu0 %v2243
  %2263 = vmatprep.subr.bf16.mxu0 0
  %2264 = vmatpush1.bf16.msra.mxu0 %v2244
  %2265 = vmatprep.subr.bf16.mxu0 0
  %2266 = vmatpush1.bf16.msra.mxu0 %v2245
  %2267 = vmatprep.subr.bf16.mxu0 0
  %2268 = vmatpush1.bf16.msra.mxu0 %v2246
  %2269 = vmatprep.subr.bf16.mxu0 0
  %2270 = vmatpush1.bf16.msra.mxu0 %v2247
  %2271 = vmatprep.subr.bf16.mxu0 0
  %2272 = vmatpush1.bf16.msra.mxu0 %v2248
  %2273 = vmatprep.subr.bf16.mxu0 0
  %2274 = vmatpush1.bf16.msra.mxu0 0
  %2275 = vmatprep.subr.bf16.mxu0 0
  %2276 = vmatpush1.bf16.msra.mxu0 0
  %2277 = vmatprep.subr.bf16.mxu0 0
  %2278 = vmatpush1.bf16.msra.mxu0 0
  %2279 = vmatprep.subr.bf16.mxu0 0
  %2280 = vmatpush1.bf16.msra.mxu0 0
  %2281 = vmatprep.subr.bf16.mxu0 0
  %2282 = vmatpush1.bf16.msra.mxu0 0
  %2283 = vmatprep.subr.bf16.mxu0 0
  %2284 = vmatpush1.bf16.msra.mxu0 0
  %2285 = vmatprep.subr.bf16.mxu0 0
  %2286 = vmatpush1.bf16.msra.mxu0 0
  %2287 = vmatprep.subr.bf16.mxu0 0
  %2288 = vmatpush1.bf16.msra.mxu0 0
  %2289 = vmatprep.mubr.bf16.mxu0 0
  %2290 = vmatmul.mubr.bf16.gmra.mrb[0].mxu0 %v2207
  %v2291 = vpop.f32.mrb[0].mxu0
  %v2292 = vadd.f32 0.0, %v2291
  %v2293 = vpop.f32.mrb[0].mxu0
  %v2294 = vpop.f32.mrb[0].mxu0
  %v2295 = vpop.f32.mrb[0].mxu0
  %2296 = vdwg.mxu0
  %v2297 = vadd.f32 %v2186, %v2292
  %v2298 = vld [vmem:[%s6] sm:$0x1]
  %v2300 = vlaneseq
  %v2301 = vshrl.u32 %v2300, 7
  %v2302 = vsub.s32 0, %v2301
  %v2303 = vrot.slane %v2298, %v2302
  %v2305 = vadd.f32 %v2297, %v2303
  %v2306 = vmax.f32 %v2305, 0.0
  %v2307 = vld [vmem:[%s7] sm:$0xff]
  %v2308 = vld [vmem:[%s7 + $0x8] sm:$0xff]
  %v2309 = vld [vmem:[%s7 + $0x10] sm:$0xff]
  %v2310 = vld [vmem:[%s7 + $0x18] sm:$0xff]
  %v2311 = vld [vmem:[#allocation2] sm:$0x1]
  %v2313 = vlaneseq
  %v2314 = vshrl.u32 %v2313, 7
  %v2315 = vsub.s32 0, %v2314
  %v2316 = vrot.slane %v2311, %v2315
  %v2319 = vsel %vm128, %v2306, 0
  %2321 = vmatprep.subr.mxu0 0.0
  %2322 = vmatpush1.msra.mxu0 %v2307
  %2323 = vmatprep.subr.mxu0 0.0
  %2324 = vmatpush1.msra.mxu0 %v2308
  %2325 = vmatprep.subr.mxu0 0.0
  %2326 = vmatpush1.msra.mxu0 %v2309
  %2327 = vmatprep.subr.mxu0 0.0
  %2328 = vmatpush1.msra.mxu0 %v2310
  %2329 = vmatprep.subr.mxu0 0.0
  %2330 = vmatpush1.msra.mxu0 0.0
  %2331 = vmatprep.subr.mxu0 0.0
  %2332 = vmatpush1.msra.mxu0 0.0
  %2333 = vmatprep.subr.mxu0 0.0
  %2334 = vmatpush1.msra.mxu0 0.0
  %2335 = vmatprep.subr.mxu0 0.0
  %2336 = vmatpush1.msra.mxu0 0.0
  %2337 = vmatprep.subr.mxu0 0.0
  %2338 = vmatpush1.msra.mxu0 0.0
  %2339 = vmatprep.subr.mxu0 0.0
  %2340 = vmatpush1.msra.mxu0 0.0
  %2341 = vmatprep.subr.mxu0 0.0
  %2342 = vmatpush1.msra.mxu0 0.0
  %2343 = vmatprep.subr.mxu0 0.0
  %2344 = vmatpush1.msra.mxu0 0.0
  %2345 = vmatprep.subr.mxu0 0.0
  %2346 = vmatpush1.msra.mxu0 0.0
  %2347 = vmatprep.subr.mxu0 0.0
  %2348 = vmatpush1.msra.mxu0 0.0
  %2349 = vmatprep.subr.mxu0 0.0
  %2350 = vmatpush1.msra.mxu0 0.0
  %2351 = vmatprep.subr.mxu0 0.0
  %2352 = vmatpush1.msra.mxu0 0.0
  %2353 = vmatprep.subr.mxu0 0.0
  %2354 = vmatpush1.msra.mxu0 0.0
  %2355 = vmatprep.subr.mxu0 0.0
  %2356 = vmatpush1.msra.mxu0 0.0
  %2357 = vmatprep.subr.mxu0 0.0
  %2358 = vmatpush1.msra.mxu0 0.0
  %2359 = vmatprep.subr.mxu0 0.0
  %2360 = vmatpush1.msra.mxu0 0.0
  %2361 = vmatprep.subr.mxu0 0.0
  %2362 = vmatpush1.msra.mxu0 0.0
  %2363 = vmatprep.subr.mxu0 0.0
  %2364 = vmatpush1.msra.mxu0 0.0
  %2365 = vmatprep.subr.mxu0 0.0
  %2366 = vmatpush1.msra.mxu0 0.0
  %2367 = vmatprep.subr.mxu0 0.0
  %2368 = vmatpush1.msra.mxu0 0.0
  %2369 = vmatprep.subr.mxu0 0.0
  %2370 = vmatpush1.msra.mxu0 0.0
  %2371 = vmatprep.subr.mxu0 0.0
  %2372 = vmatpush1.msra.mxu0 0.0
  %2373 = vmatprep.subr.mxu0 0.0
  %2374 = vmatpush1.msra.mxu0 0.0
  %2375 = vmatprep.subr.mxu0 0.0
  %2376 = vmatpush1.msra.mxu0 0.0
  %2377 = vmatprep.subr.mxu0 0.0
  %2378 = vmatpush1.msra.mxu0 0.0
  %2379 = vmatprep.subr.mxu0 0.0
  %2380 = vmatpush1.msra.mxu0 0.0
  %2381 = vmatprep.subr.mxu0 0.0
  %2382 = vmatpush1.msra.mxu0 0.0
  %2383 = vmatprep.subr.mxu0 0.0
  %2384 = vmatpush1.msra.mxu0 0.0
  %2385 = vmatprep.mubr.f32.mxu0 0.0
  %2386 = vmatmul.mubr.f32.gmra.mrb[0].mxu0 %v2319
  %v2387 = vpop.f32.mrb[0].mxu0
  %v2388 = vadd.f32 %v2316, %v2387
  %v2389 = vpop.f32.mrb[0].mxu0
  %2390 = vdwg.mxu0
  %vm2391 = vcmask 1024
  %2392 = vst.msk [vmem:[%s9] sm:$0x3] %vm2391, %v2388
  // Predicated region
  $region38: #{even_shallower_cnn_forward.1} parent=0 // pred_check
    _
  $region39: #{even_shallower_cnn_forward.1} parent=0 // pred_check_branch
    %2394 = sbr.rel (0) target = $region41
  $region40: #{even_shallower_cnn_forward.1} parent=0 // pred_region
    _
  $region41: #{even_shallower_cnn_forward.1} parent=0 // pred_fallthru
    _
  // Predicated region
  $region42: #{even_shallower_cnn_forward.1} parent=0 // pred_check
    _
  $region43: #{even_shallower_cnn_forward.1} parent=0 // pred_check_branch
    %2396 = sbr.rel (0) target = $region45
  $region44: #{even_shallower_cnn_forward.1} parent=0 // pred_region
    _
  $region45: #{even_shallower_cnn_forward.1} parent=0 // pred_fallthru
    _

</llo_original>
